<compile_context>
chip_gen: v5e
topology: v5e:2x2
jax: 0.10.0
libtpu: 0.0.40
codegen_flags: <defaults>
</compile_context>

<pallas_src>
import functools

import jax
import jax.numpy as jnp
from jax import lax
from jax.experimental import pallas as pl
from jax.experimental.pallas import tpu as pltpu


def _upsampler_fused_kernel(x_ref, w_ref, p_ref, o_ref, *, H, W, eps):
    """Fused ConvTranspose2d(3x3, s=2, p=1, op=1) + bias + BatchNorm(train) + ReLU.

    x_ref: (N, Cin, H*W + W + 1) f32  row-major flattened input with a zero tail
    w_ref: (Cout, 9*Cin)        f32  w[co, (kh*3+kw)*Cin + ci] = W_t[ci, co, kh, kw]
    p_ref: (Cout, 3)            f32  columns: conv bias, bn gamma, bn beta
    o_ref: (N, Cout, 4*H*W)     f32  phase-major output; phase p = dr*2+dc occupies
                                     lanes [p*H*W, (p+1)*H*W)
    """
    N, Cin = x_ref.shape[0], x_ref.shape[1]
    Cout = o_ref.shape[1]
    HW = H * W
    K = 3

    # Interior-column mask: "+1 column" taps must read 0 at c == W-1 (otherwise the
    # flat layout would wrap into column 0 of the next row).
    col = lax.broadcasted_iota(jnp.int32, (1, 1, HW), 2) % W
    in_col = (col < (W - 1)).astype(jnp.float32)

    # Four shifted views of the dense input. "+1 row" reads land in the zero tail
    # for the last row automatically; "+1 column" reads additionally use in_col.
    x00 = x_ref[:, :, 0:HW]                        # x[r,   c  ]
    x01 = x_ref[:, :, 1:1 + HW] * in_col           # x[r,   c+1]
    x10 = x_ref[:, :, W:W + HW]                    # x[r+1, c  ]
    x11 = x_ref[:, :, W + 1:W + 1 + HW] * in_col   # x[r+1, c+1]

    def split_ci(xs):  # -> list of (N, 1, HW), one per input channel
        return [xs[:, ci:ci + 1, :] for ci in range(Cin)]

    x00s, x01s, x10s, x11s = split_ci(x00), split_ci(x01), split_ci(x10), split_ci(x11)

    def wcol(kh, kw, ci):  # (Cout, 1) weight column for tap (kh, kw), channel ci
        idx = (kh * K + kw) * Cin + ci
        return w_ref[:, idx:idx + 1]

    def accum(acc, xs_s, kh, kw):
        for ci in range(Cin):
            # (N,1,HW) * (Cout,1) -> (N,Cout,HW) lane-dense VPU MAC
            acc = acc + xs_s[ci] * wcol(kh, kw, ci)
        return acc

    bias = p_ref[:, 0:1]    # (Cout, 1)
    gamma = p_ref[:, 1:2]
    beta = p_ref[:, 2:3]

    # Output phase (dr, dc): out[2r+dr, 2c+dc] = sum of the listed (shift, kh, kw) taps.
    phases = [
        [(x00s, 1, 1)],                                             # (dr, dc) = (0, 0)
        [(x01s, 1, 0), (x00s, 1, 2)],                               # (0, 1)
        [(x10s, 0, 1), (x00s, 2, 1)],                               # (1, 0)
        [(x11s, 0, 0), (x10s, 0, 2), (x01s, 2, 0), (x00s, 2, 2)],   # (1, 1)
    ]

    s = jnp.zeros((1, Cout, 1), jnp.float32)
    ss = jnp.zeros((1, Cout, 1), jnp.float32)
    for p, taps in enumerate(phases):
        acc = jnp.zeros((N, Cout, HW), jnp.float32)
        for xs_s, kh, kw in taps:
            acc = accum(acc, xs_s, kh, kw)
        y = acc + bias
        o_ref[:, :, p * HW:(p + 1) * HW] = y          # lane-aligned dense store
        s = s + jnp.sum(y, axis=(0, 2), keepdims=True)
        ss = ss + jnp.sum(y * y, axis=(0, 2), keepdims=True)

    # BatchNorm over the full batch (PyTorch training-mode forward: biased variance).
    inv_cnt = 1.0 / float(N * 4 * HW)                 # = 1 / (N * H_out * W_out)
    mean = s * inv_cnt
    var = ss * inv_cnt - mean * mean
    scale = gamma * lax.rsqrt(var + eps)              # (1, Cout, 1)
    shift = beta - mean * scale

    # Normalize + ReLU in place (conv result never left VMEM).
    for p in range(4):
        y = o_ref[:, :, p * HW:(p + 1) * HW]
        o_ref[:, :, p * HW:(p + 1) * HW] = jnp.maximum(y * scale + shift, 0.0)


def upsampler_block(x_nchw, w_t, bias, gamma, beta, *, eps=1e-3):
    """x_nchw: (N, Cin, H, W); w_t: (Cin, Cout, 3, 3) torch ConvTranspose2d layout."""
    N, Cin, H, W = x_nchw.shape
    Cout, K = w_t.shape[1], w_t.shape[2]
    assert K == 3 and w_t.shape == (Cin, Cout, 3, 3)
    HW = H * W

    # Pure layout glue (no FLOPs): flatten spatial onto lanes, append W+1 zero
    # lanes for the "+1 row" taps, pack weights/params into single VMEM tiles.
    x_flat = x_nchw.astype(jnp.float32).reshape(N, Cin, HW)
    x_pad = jnp.pad(x_flat, ((0, 0), (0, 0), (0, W + 1)))
    w2 = jnp.transpose(w_t.astype(jnp.float32), (1, 2, 3, 0)).reshape(Cout, K * K * Cin)
    params = jnp.stack([bias, gamma, beta], axis=1).astype(jnp.float32)   # (Cout, 3)

    out_flat = pl.pallas_call(
        functools.partial(_upsampler_fused_kernel, H=H, W=W, eps=eps),
        out_shape=jax.ShapeDtypeStruct((N, Cout, 4 * HW), jnp.float32),
        grid=(1,),
        in_specs=[
            pl.BlockSpec((N, Cin, HW + W + 1), lambda i: (0, 0, 0)),
            pl.BlockSpec((Cout, K * K * Cin), lambda i: (0, 0)),
            pl.BlockSpec((Cout, 3), lambda i: (0, 0)),
        ],
        out_specs=pl.BlockSpec((N, Cout, 4 * HW), lambda i: (0, 0, 0)),
        compiler_params=pltpu.CompilerParams(dimension_semantics=("arbitrary",)),
    )(x_pad, w2, params)

    # De-interleave phases: (N,Cout,dr,dc,H,W) -> (N,Cout,H,dr,W,dc) -> (N,Cout,2H,2W).
    out = out_flat.reshape(N, Cout, 2, 2, H, W)
    out = jnp.transpose(out, (0, 1, 4, 2, 5, 3)).reshape(N, Cout, 2 * H, 2 * W)
    return out


def upsampler_block_reference(x_nchw, w_t, bias, gamma, beta, *, eps=1e-3):
    """Pure-jnp reference built directly from the scatter definition of ConvTranspose2d."""
    N, Cin, H, W = x_nchw.shape
    Cout, K = w_t.shape[1], w_t.shape[2]
    stride, pad, out_pad = 2, 1, 1
    H_out = (H - 1) * stride - 2 * pad + K + out_pad
    W_out = (W - 1) * stride - 2 * pad + K + out_pad
    x = jnp.transpose(x_nchw, (0, 2, 3, 1)).astype(jnp.float32)
    full = jnp.zeros((N, (H - 1) * stride + K, (W - 1) * stride + K, Cout), jnp.float32)
    for kh in range(K):
        for kw in range(K):
            contrib = jnp.einsum("nhwi,io->nhwo", x, w_t[:, :, kh, kw])
            full = full.at[:, kh:kh + (H - 1) * stride + 1:stride,
                              kw:kw + (W - 1) * stride + 1:stride, :].add(contrib)
    y = full[:, pad:pad + H_out, pad:pad + W_out, :] + bias
    mean = jnp.mean(y, axis=(0, 1, 2), keepdims=True)
    var = jnp.mean((y - mean) ** 2, axis=(0, 1, 2), keepdims=True)
    out = jnp.maximum((y - mean) / jnp.sqrt(var + eps) * gamma + beta, 0.0)
    return jnp.transpose(out, (0, 3, 1, 2))


if __name__ == "__main__":
    ninput, noutput = 4, 8
    N, H, W = 2, 16, 16

    key = jax.random.PRNGKey(0)
    kx, kw, kb, kg, kbeta = jax.random.split(key, 5)
    x = jax.random.normal(kx, (N, ninput, H, W), jnp.float32)
    w = jax.random.normal(kw, (ninput, noutput, 3, 3), jnp.float32) * 0.1
    bias = jax.random.normal(kb, (noutput,), jnp.float32) * 0.1
    gamma = 1.0 + 0.1 * jax.random.normal(kg, (noutput,), jnp.float32)
    beta = 0.1 * jax.random.normal(kbeta, (noutput,), jnp.float32)

    out = jax.block_until_ready(upsampler_block(x, w, bias, gamma, beta, eps=1e-3))
    ref = jax.block_until_ready(upsampler_block_reference(x, w, bias, gamma, beta, eps=1e-3))

    assert out.shape == (N, noutput, 2 * H, 2 * W), out.shape
    assert jnp.allclose(out, ref, atol=2e-3, rtol=2e-3), float(jnp.max(jnp.abs(out - ref)))
    print("KERNEL_OK")
</pallas_src>

<mosaic_0001>
module attributes {stable_mosaic.version = 11 : i64} {
  func.func @_upsampler_fused_kernel(%arg0: i32, %arg1: memref<2x4x273xf32, #tpu.memory_space<vmem>>, %arg2: memref<8x36xf32, #tpu.memory_space<vmem>>, %arg3: memref<8x3xf32, #tpu.memory_space<vmem>>, %arg4: memref<2x8x1024xf32, #tpu.memory_space<vmem>>) attributes {dimension_semantics = [#tpu.dimension_semantics<arbitrary>], iteration_bounds = array<i64: 1>, scalar_prefetch = 0 : i64, scratch_operands = 0 : i64, tpu.core_type = #tpu.core_type<tc>, window_params = [{pipeline_mode = #tpu.pipeline_mode<synchronous>, transform_indices = @transform_0, window_bounds = array<i64: 2, 4, 273>}, {pipeline_mode = #tpu.pipeline_mode<synchronous>, transform_indices = @transform_1, window_bounds = array<i64: 8, 36>}, {pipeline_mode = #tpu.pipeline_mode<synchronous>, transform_indices = @transform_2, window_bounds = array<i64: 8, 3>}, {pipeline_mode = #tpu.pipeline_mode<synchronous>, transform_indices = @transform_3, window_bounds = array<i64: 2, 8, 1024>}]} {
    %0 = tpu.iota {dimensions = array<i32: 2>} : vector<1x1x256xi32>
    %c16_i32 = arith.constant 16 : i32
    %c0_i32 = arith.constant 0 : i32
    %1 = arith.cmpi eq, %c16_i32, %c0_i32 : i32
    %c1_i32 = arith.constant 1 : i32
    %2 = arith.select %1, %c1_i32, %c16_i32 : i32
    %3 = vector.broadcast %2 : i32 to vector<1x1x256xi32>
    %4 = arith.remsi %0, %3 : vector<1x1x256xi32>
    %c0_i32_0 = arith.constant 0 : i32
    %5 = vector.broadcast %c0_i32_0 : i32 to vector<1x1x256xi32>
    %6 = arith.cmpi ne, %4, %5 : vector<1x1x256xi32>
    %c0_i32_1 = arith.constant 0 : i32
    %7 = vector.broadcast %c0_i32_1 : i32 to vector<1x1x256xi32>
    %8 = arith.cmpi slt, %4, %7 : vector<1x1x256xi32>
    %c0_i32_2 = arith.constant 0 : i32
    %9 = arith.cmpi slt, %2, %c0_i32_2 : i32
    %10 = vector.broadcast %9 : i1 to vector<1x1x256xi1>
    %11 = vector.broadcast %10 : vector<1x1x256xi1> to vector<1x1x256xi1>
    %12 = arith.xori %8, %11 : vector<1x1x256xi1>
    %13 = arith.andi %12, %6 : vector<1x1x256xi1>
    %14 = vector.broadcast %2 : i32 to vector<1x1x256xi32>
    %15 = arith.addi %4, %14 : vector<1x1x256xi32>
    %16 = arith.select %13, %15, %4 : vector<1x1x256xi1>, vector<1x1x256xi32>
    %c15_i32 = arith.constant 15 : i32
    %17 = vector.broadcast %c15_i32 : i32 to vector<1x1x256xi32>
    %18 = arith.cmpi slt, %16, %17 : vector<1x1x256xi32>
    %19 = arith.extui %18 : vector<1x1x256xi1> to vector<1x1x256xi32>
    %20 = arith.sitofp %19 : vector<1x1x256xi32> to vector<1x1x256xf32>
    %c0 = arith.constant 0 : index
    %c0_3 = arith.constant 0 : index
    %c0_4 = arith.constant 0 : index
    %21 = vector.load %arg1[%c0, %c0_3, %c0_4] : memref<2x4x273xf32, #tpu.memory_space<vmem>>, vector<2x4x256xf32>
    %c0_5 = arith.constant 0 : index
    %c0_6 = arith.constant 0 : index
    %c1 = arith.constant 1 : index
    %22 = vector.load %arg1[%c0_5, %c0_6, %c1] : memref<2x4x273xf32, #tpu.memory_space<vmem>>, vector<2x4x256xf32>
    %23 = vector.broadcast %20 : vector<1x1x256xf32> to vector<2x4x256xf32>
    %24 = arith.mulf %22, %23 : vector<2x4x256xf32>
    %c0_7 = arith.constant 0 : index
    %c0_8 = arith.constant 0 : index
    %c16 = arith.constant 16 : index
    %25 = vector.load %arg1[%c0_7, %c0_8, %c16] : memref<2x4x273xf32, #tpu.memory_space<vmem>>, vector<2x4x256xf32>
    %c0_9 = arith.constant 0 : index
    %c0_10 = arith.constant 0 : index
    %c17 = arith.constant 17 : index
    %26 = vector.load %arg1[%c0_9, %c0_10, %c17] : memref<2x4x273xf32, #tpu.memory_space<vmem>>, vector<2x4x256xf32>
    %27 = vector.broadcast %20 : vector<1x1x256xf32> to vector<2x4x256xf32>
    %28 = arith.mulf %26, %27 : vector<2x4x256xf32>
    %29 = vector.extract_strided_slice %21 {offsets = [0, 0, 0], sizes = [2, 1, 256], strides = [1, 1, 1]} : vector<2x4x256xf32> to vector<2x1x256xf32>
    %30 = vector.extract_strided_slice %21 {offsets = [0, 1, 0], sizes = [2, 1, 256], strides = [1, 1, 1]} : vector<2x4x256xf32> to vector<2x1x256xf32>
    %31 = vector.extract_strided_slice %21 {offsets = [0, 2, 0], sizes = [2, 1, 256], strides = [1, 1, 1]} : vector<2x4x256xf32> to vector<2x1x256xf32>
    %32 = vector.extract_strided_slice %21 {offsets = [0, 3, 0], sizes = [2, 1, 256], strides = [1, 1, 1]} : vector<2x4x256xf32> to vector<2x1x256xf32>
    %33 = vector.extract_strided_slice %24 {offsets = [0, 0, 0], sizes = [2, 1, 256], strides = [1, 1, 1]} : vector<2x4x256xf32> to vector<2x1x256xf32>
    %34 = vector.extract_strided_slice %24 {offsets = [0, 1, 0], sizes = [2, 1, 256], strides = [1, 1, 1]} : vector<2x4x256xf32> to vector<2x1x256xf32>
    %35 = vector.extract_strided_slice %24 {offsets = [0, 2, 0], sizes = [2, 1, 256], strides = [1, 1, 1]} : vector<2x4x256xf32> to vector<2x1x256xf32>
    %36 = vector.extract_strided_slice %24 {offsets = [0, 3, 0], sizes = [2, 1, 256], strides = [1, 1, 1]} : vector<2x4x256xf32> to vector<2x1x256xf32>
    %37 = vector.extract_strided_slice %25 {offsets = [0, 0, 0], sizes = [2, 1, 256], strides = [1, 1, 1]} : vector<2x4x256xf32> to vector<2x1x256xf32>
    %38 = vector.extract_strided_slice %25 {offsets = [0, 1, 0], sizes = [2, 1, 256], strides = [1, 1, 1]} : vector<2x4x256xf32> to vector<2x1x256xf32>
    %39 = vector.extract_strided_slice %25 {offsets = [0, 2, 0], sizes = [2, 1, 256], strides = [1, 1, 1]} : vector<2x4x256xf32> to vector<2x1x256xf32>
    %40 = vector.extract_strided_slice %25 {offsets = [0, 3, 0], sizes = [2, 1, 256], strides = [1, 1, 1]} : vector<2x4x256xf32> to vector<2x1x256xf32>
    %41 = vector.extract_strided_slice %28 {offsets = [0, 0, 0], sizes = [2, 1, 256], strides = [1, 1, 1]} : vector<2x4x256xf32> to vector<2x1x256xf32>
    %42 = vector.extract_strided_slice %28 {offsets = [0, 1, 0], sizes = [2, 1, 256], strides = [1, 1, 1]} : vector<2x4x256xf32> to vector<2x1x256xf32>
    %43 = vector.extract_strided_slice %28 {offsets = [0, 2, 0], sizes = [2, 1, 256], strides = [1, 1, 1]} : vector<2x4x256xf32> to vector<2x1x256xf32>
    %44 = vector.extract_strided_slice %28 {offsets = [0, 3, 0], sizes = [2, 1, 256], strides = [1, 1, 1]} : vector<2x4x256xf32> to vector<2x1x256xf32>
    %c0_11 = arith.constant 0 : index
    %c0_12 = arith.constant 0 : index
    %45 = vector.load %arg3[%c0_11, %c0_12] : memref<8x3xf32, #tpu.memory_space<vmem>>, vector<8x1xf32>
    %c0_13 = arith.constant 0 : index
    %c1_14 = arith.constant 1 : index
    %46 = vector.load %arg3[%c0_13, %c1_14] : memref<8x3xf32, #tpu.memory_space<vmem>>, vector<8x1xf32>
    %c0_15 = arith.constant 0 : index
    %c2 = arith.constant 2 : index
    %47 = vector.load %arg3[%c0_15, %c2] : memref<8x3xf32, #tpu.memory_space<vmem>>, vector<8x1xf32>
    %cst = arith.constant 0.000000e+00 : f32
    %48 = vector.broadcast %cst : f32 to vector<1x8x1xf32>
    %cst_16 = arith.constant 0.000000e+00 : f32
    %49 = vector.broadcast %cst_16 : f32 to vector<1x8x1xf32>
    %cst_17 = arith.constant 0.000000e+00 : f32
    %50 = vector.broadcast %cst_17 : f32 to vector<2x8x256xf32>
    %c0_18 = arith.constant 0 : index
    %c16_19 = arith.constant 16 : index
    %51 = vector.load %arg2[%c0_18, %c16_19] : memref<8x36xf32, #tpu.memory_space<vmem>>, vector<8x1xf32>
    %52 = vector.shape_cast %51 : vector<8x1xf32> to vector<1x8x1xf32>
    %53 = vector.broadcast %29 : vector<2x1x256xf32> to vector<2x8x256xf32>
    %54 = vector.broadcast %52 : vector<1x8x1xf32> to vector<2x8x256xf32>
    %55 = arith.mulf %53, %54 : vector<2x8x256xf32>
    %56 = arith.addf %50, %55 : vector<2x8x256xf32>
    %c0_20 = arith.constant 0 : index
    %c17_21 = arith.constant 17 : index
    %57 = vector.load %arg2[%c0_20, %c17_21] : memref<8x36xf32, #tpu.memory_space<vmem>>, vector<8x1xf32>
    %58 = vector.shape_cast %57 : vector<8x1xf32> to vector<1x8x1xf32>
    %59 = vector.broadcast %30 : vector<2x1x256xf32> to vector<2x8x256xf32>
    %60 = vector.broadcast %58 : vector<1x8x1xf32> to vector<2x8x256xf32>
    %61 = arith.mulf %59, %60 : vector<2x8x256xf32>
    %62 = arith.addf %56, %61 : vector<2x8x256xf32>
    %c0_22 = arith.constant 0 : index
    %c18 = arith.constant 18 : index
    %63 = vector.load %arg2[%c0_22, %c18] : memref<8x36xf32, #tpu.memory_space<vmem>>, vector<8x1xf32>
    %64 = vector.shape_cast %63 : vector<8x1xf32> to vector<1x8x1xf32>
    %65 = vector.broadcast %31 : vector<2x1x256xf32> to vector<2x8x256xf32>
    %66 = vector.broadcast %64 : vector<1x8x1xf32> to vector<2x8x256xf32>
    %67 = arith.mulf %65, %66 : vector<2x8x256xf32>
    %68 = arith.addf %62, %67 : vector<2x8x256xf32>
    %c0_23 = arith.constant 0 : index
    %c19 = arith.constant 19 : index
    %69 = vector.load %arg2[%c0_23, %c19] : memref<8x36xf32, #tpu.memory_space<vmem>>, vector<8x1xf32>
    %70 = vector.shape_cast %69 : vector<8x1xf32> to vector<1x8x1xf32>
    %71 = vector.broadcast %32 : vector<2x1x256xf32> to vector<2x8x256xf32>
    %72 = vector.broadcast %70 : vector<1x8x1xf32> to vector<2x8x256xf32>
    %73 = arith.mulf %71, %72 : vector<2x8x256xf32>
    %74 = arith.addf %68, %73 : vector<2x8x256xf32>
    %75 = vector.shape_cast %45 : vector<8x1xf32> to vector<1x8x1xf32>
    %76 = vector.broadcast %75 : vector<1x8x1xf32> to vector<2x8x256xf32>
    %77 = arith.addf %74, %76 : vector<2x8x256xf32>
    %c0_24 = arith.constant 0 : index
    %c0_25 = arith.constant 0 : index
    %c0_26 = arith.constant 0 : index
    %78 = vector.load %arg4[%c0_24, %c0_25, %c0_26] : memref<2x8x1024xf32, #tpu.memory_space<vmem>>, vector<2x8x256xf32>
    tpu.vector_store %arg4[%c0_24, %c0_25, %c0_26], %77 {strides = array<i32>} : memref<2x8x1024xf32, #tpu.memory_space<vmem>>, vector<2x8x256xf32>,
    %cst_27 = arith.constant dense<0.000000e+00> : vector<8xf32>
    %79 = vector.multi_reduction <add>, %77, %cst_27 [0, 2] : vector<2x8x256xf32> to vector<8xf32>
    %80 = vector.shape_cast %79 : vector<8xf32> to vector<1x8x1xf32>
    %81 = arith.addf %48, %80 : vector<1x8x1xf32>
    %82 = arith.mulf %77, %77 : vector<2x8x256xf32>
    %cst_28 = arith.constant dense<0.000000e+00> : vector<8xf32>
    %83 = vector.multi_reduction <add>, %82, %cst_28 [0, 2] : vector<2x8x256xf32> to vector<8xf32>
    %84 = vector.shape_cast %83 : vector<8xf32> to vector<1x8x1xf32>
    %85 = arith.addf %49, %84 : vector<1x8x1xf32>
    %cst_29 = arith.constant 0.000000e+00 : f32
    %86 = vector.broadcast %cst_29 : f32 to vector<2x8x256xf32>
    %c0_30 = arith.constant 0 : index
    %c12 = arith.constant 12 : index
    %87 = vector.load %arg2[%c0_30, %c12] : memref<8x36xf32, #tpu.memory_space<vmem>>, vector<8x1xf32>
    %88 = vector.shape_cast %87 : vector<8x1xf32> to vector<1x8x1xf32>
    %89 = vector.broadcast %33 : vector<2x1x256xf32> to vector<2x8x256xf32>
    %90 = vector.broadcast %88 : vector<1x8x1xf32> to vector<2x8x256xf32>
    %91 = arith.mulf %89, %90 : vector<2x8x256xf32>
    %92 = arith.addf %86, %91 : vector<2x8x256xf32>
    %c0_31 = arith.constant 0 : index
    %c13 = arith.constant 13 : index
    %93 = vector.load %arg2[%c0_31, %c13] : memref<8x36xf32, #tpu.memory_space<vmem>>, vector<8x1xf32>
    %94 = vector.shape_cast %93 : vector<8x1xf32> to vector<1x8x1xf32>
    %95 = vector.broadcast %34 : vector<2x1x256xf32> to vector<2x8x256xf32>
    %96 = vector.broadcast %94 : vector<1x8x1xf32> to vector<2x8x256xf32>
    %97 = arith.mulf %95, %96 : vector<2x8x256xf32>
    %98 = arith.addf %92, %97 : vector<2x8x256xf32>
    %c0_32 = arith.constant 0 : index
    %c14 = arith.constant 14 : index
    %99 = vector.load %arg2[%c0_32, %c14] : memref<8x36xf32, #tpu.memory_space<vmem>>, vector<8x1xf32>
    %100 = vector.shape_cast %99 : vector<8x1xf32> to vector<1x8x1xf32>
    %101 = vector.broadcast %35 : vector<2x1x256xf32> to vector<2x8x256xf32>
    %102 = vector.broadcast %100 : vector<1x8x1xf32> to vector<2x8x256xf32>
    %103 = arith.mulf %101, %102 : vector<2x8x256xf32>
    %104 = arith.addf %98, %103 : vector<2x8x256xf32>
    %c0_33 = arith.constant 0 : index
    %c15 = arith.constant 15 : index
    %105 = vector.load %arg2[%c0_33, %c15] : memref<8x36xf32, #tpu.memory_space<vmem>>, vector<8x1xf32>
    %106 = vector.shape_cast %105 : vector<8x1xf32> to vector<1x8x1xf32>
    %107 = vector.broadcast %36 : vector<2x1x256xf32> to vector<2x8x256xf32>
    %108 = vector.broadcast %106 : vector<1x8x1xf32> to vector<2x8x256xf32>
    %109 = arith.mulf %107, %108 : vector<2x8x256xf32>
    %110 = arith.addf %104, %109 : vector<2x8x256xf32>
    %c0_34 = arith.constant 0 : index
    %c20 = arith.constant 20 : index
    %111 = vector.load %arg2[%c0_34, %c20] : memref<8x36xf32, #tpu.memory_space<vmem>>, vector<8x1xf32>
    %112 = vector.shape_cast %111 : vector<8x1xf32> to vector<1x8x1xf32>
    %113 = vector.broadcast %29 : vector<2x1x256xf32> to vector<2x8x256xf32>
    %114 = vector.broadcast %112 : vector<1x8x1xf32> to vector<2x8x256xf32>
    %115 = arith.mulf %113, %114 : vector<2x8x256xf32>
    %116 = arith.addf %110, %115 : vector<2x8x256xf32>
    %c0_35 = arith.constant 0 : index
    %c21 = arith.constant 21 : index
    %117 = vector.load %arg2[%c0_35, %c21] : memref<8x36xf32, #tpu.memory_space<vmem>>, vector<8x1xf32>
    %118 = vector.shape_cast %117 : vector<8x1xf32> to vector<1x8x1xf32>
    %119 = vector.broadcast %30 : vector<2x1x256xf32> to vector<2x8x256xf32>
    %120 = vector.broadcast %118 : vector<1x8x1xf32> to vector<2x8x256xf32>
    %121 = arith.mulf %119, %120 : vector<2x8x256xf32>
    %122 = arith.addf %116, %121 : vector<2x8x256xf32>
    %c0_36 = arith.constant 0 : index
    %c22 = arith.constant 22 : index
    %123 = vector.load %arg2[%c0_36, %c22] : memref<8x36xf32, #tpu.memory_space<vmem>>, vector<8x1xf32>
    %124 = vector.shape_cast %123 : vector<8x1xf32> to vector<1x8x1xf32>
    %125 = vector.broadcast %31 : vector<2x1x256xf32> to vector<2x8x256xf32>
    %126 = vector.broadcast %124 : vector<1x8x1xf32> to vector<2x8x256xf32>
    %127 = arith.mulf %125, %126 : vector<2x8x256xf32>
    %128 = arith.addf %122, %127 : vector<2x8x256xf32>
    %c0_37 = arith.constant 0 : index
    %c23 = arith.constant 23 : index
    %129 = vector.load %arg2[%c0_37, %c23] : memref<8x36xf32, #tpu.memory_space<vmem>>, vector<8x1xf32>
    %130 = vector.shape_cast %129 : vector<8x1xf32> to vector<1x8x1xf32>
    %131 = vector.broadcast %32 : vector<2x1x256xf32> to vector<2x8x256xf32>
    %132 = vector.broadcast %130 : vector<1x8x1xf32> to vector<2x8x256xf32>
    %133 = arith.mulf %131, %132 : vector<2x8x256xf32>
    %134 = arith.addf %128, %133 : vector<2x8x256xf32>
    %135 = vector.shape_cast %45 : vector<8x1xf32> to vector<1x8x1xf32>
    %136 = vector.broadcast %135 : vector<1x8x1xf32> to vector<2x8x256xf32>
    %137 = arith.addf %134, %136 : vector<2x8x256xf32>
    %c0_38 = arith.constant 0 : index
    %c0_39 = arith.constant 0 : index
    %c256 = arith.constant 256 : index
    %138 = vector.load %arg4[%c0_38, %c0_39, %c256] : memref<2x8x1024xf32, #tpu.memory_space<vmem>>, vector<2x8x256xf32>
    tpu.vector_store %arg4[%c0_38, %c0_39, %c256], %137 {strides = array<i32>} : memref<2x8x1024xf32, #tpu.memory_space<vmem>>, vector<2x8x256xf32>,
    %cst_40 = arith.constant dense<0.000000e+00> : vector<8xf32>
    %139 = vector.multi_reduction <add>, %137, %cst_40 [0, 2] : vector<2x8x256xf32> to vector<8xf32>
    %140 = vector.shape_cast %139 : vector<8xf32> to vector<1x8x1xf32>
    %141 = arith.addf %81, %140 : vector<1x8x1xf32>
    %142 = arith.mulf %137, %137 : vector<2x8x256xf32>
    %cst_41 = arith.constant dense<0.000000e+00> : vector<8xf32>
    %143 = vector.multi_reduction <add>, %142, %cst_41 [0, 2] : vector<2x8x256xf32> to vector<8xf32>
    %144 = vector.shape_cast %143 : vector<8xf32> to vector<1x8x1xf32>
    %145 = arith.addf %85, %144 : vector<1x8x1xf32>
    %cst_42 = arith.constant 0.000000e+00 : f32
    %146 = vector.broadcast %cst_42 : f32 to vector<2x8x256xf32>
    %c0_43 = arith.constant 0 : index
    %c4 = arith.constant 4 : index
    %147 = vector.load %arg2[%c0_43, %c4] : memref<8x36xf32, #tpu.memory_space<vmem>>, vector<8x1xf32>
    %148 = vector.shape_cast %147 : vector<8x1xf32> to vector<1x8x1xf32>
    %149 = vector.broadcast %37 : vector<2x1x256xf32> to vector<2x8x256xf32>
    %150 = vector.broadcast %148 : vector<1x8x1xf32> to vector<2x8x256xf32>
    %151 = arith.mulf %149, %150 : vector<2x8x256xf32>
    %152 = arith.addf %146, %151 : vector<2x8x256xf32>
    %c0_44 = arith.constant 0 : index
    %c5 = arith.constant 5 : index
    %153 = vector.load %arg2[%c0_44, %c5] : memref<8x36xf32, #tpu.memory_space<vmem>>, vector<8x1xf32>
    %154 = vector.shape_cast %153 : vector<8x1xf32> to vector<1x8x1xf32>
    %155 = vector.broadcast %38 : vector<2x1x256xf32> to vector<2x8x256xf32>
    %156 = vector.broadcast %154 : vector<1x8x1xf32> to vector<2x8x256xf32>
    %157 = arith.mulf %155, %156 : vector<2x8x256xf32>
    %158 = arith.addf %152, %157 : vector<2x8x256xf32>
    %c0_45 = arith.constant 0 : index
    %c6 = arith.constant 6 : index
    %159 = vector.load %arg2[%c0_45, %c6] : memref<8x36xf32, #tpu.memory_space<vmem>>, vector<8x1xf32>
    %160 = vector.shape_cast %159 : vector<8x1xf32> to vector<1x8x1xf32>
    %161 = vector.broadcast %39 : vector<2x1x256xf32> to vector<2x8x256xf32>
    %162 = vector.broadcast %160 : vector<1x8x1xf32> to vector<2x8x256xf32>
    %163 = arith.mulf %161, %162 : vector<2x8x256xf32>
    %164 = arith.addf %158, %163 : vector<2x8x256xf32>
    %c0_46 = arith.constant 0 : index
    %c7 = arith.constant 7 : index
    %165 = vector.load %arg2[%c0_46, %c7] : memref<8x36xf32, #tpu.memory_space<vmem>>, vector<8x1xf32>
    %166 = vector.shape_cast %165 : vector<8x1xf32> to vector<1x8x1xf32>
    %167 = vector.broadcast %40 : vector<2x1x256xf32> to vector<2x8x256xf32>
    %168 = vector.broadcast %166 : vector<1x8x1xf32> to vector<2x8x256xf32>
    %169 = arith.mulf %167, %168 : vector<2x8x256xf32>
    %170 = arith.addf %164, %169 : vector<2x8x256xf32>
    %c0_47 = arith.constant 0 : index
    %c28 = arith.constant 28 : index
    %171 = vector.load %arg2[%c0_47, %c28] : memref<8x36xf32, #tpu.memory_space<vmem>>, vector<8x1xf32>
    %172 = vector.shape_cast %171 : vector<8x1xf32> to vector<1x8x1xf32>
    %173 = vector.broadcast %29 : vector<2x1x256xf32> to vector<2x8x256xf32>
    %174 = vector.broadcast %172 : vector<1x8x1xf32> to vector<2x8x256xf32>
    %175 = arith.mulf %173, %174 : vector<2x8x256xf32>
    %176 = arith.addf %170, %175 : vector<2x8x256xf32>
    %c0_48 = arith.constant 0 : index
    %c29 = arith.constant 29 : index
    %177 = vector.load %arg2[%c0_48, %c29] : memref<8x36xf32, #tpu.memory_space<vmem>>, vector<8x1xf32>
    %178 = vector.shape_cast %177 : vector<8x1xf32> to vector<1x8x1xf32>
    %179 = vector.broadcast %30 : vector<2x1x256xf32> to vector<2x8x256xf32>
    %180 = vector.broadcast %178 : vector<1x8x1xf32> to vector<2x8x256xf32>
    %181 = arith.mulf %179, %180 : vector<2x8x256xf32>
    %182 = arith.addf %176, %181 : vector<2x8x256xf32>
    %c0_49 = arith.constant 0 : index
    %c30 = arith.constant 30 : index
    %183 = vector.load %arg2[%c0_49, %c30] : memref<8x36xf32, #tpu.memory_space<vmem>>, vector<8x1xf32>
    %184 = vector.shape_cast %183 : vector<8x1xf32> to vector<1x8x1xf32>
    %185 = vector.broadcast %31 : vector<2x1x256xf32> to vector<2x8x256xf32>
    %186 = vector.broadcast %184 : vector<1x8x1xf32> to vector<2x8x256xf32>
    %187 = arith.mulf %185, %186 : vector<2x8x256xf32>
    %188 = arith.addf %182, %187 : vector<2x8x256xf32>
    %c0_50 = arith.constant 0 : index
    %c31 = arith.constant 31 : index
    %189 = vector.load %arg2[%c0_50, %c31] : memref<8x36xf32, #tpu.memory_space<vmem>>, vector<8x1xf32>
    %190 = vector.shape_cast %189 : vector<8x1xf32> to vector<1x8x1xf32>
    %191 = vector.broadcast %32 : vector<2x1x256xf32> to vector<2x8x256xf32>
    %192 = vector.broadcast %190 : vector<1x8x1xf32> to vector<2x8x256xf32>
    %193 = arith.mulf %191, %192 : vector<2x8x256xf32>
    %194 = arith.addf %188, %193 : vector<2x8x256xf32>
    %195 = vector.shape_cast %45 : vector<8x1xf32> to vector<1x8x1xf32>
    %196 = vector.broadcast %195 : vector<1x8x1xf32> to vector<2x8x256xf32>
    %197 = arith.addf %194, %196 : vector<2x8x256xf32>
    %c0_51 = arith.constant 0 : index
    %c0_52 = arith.constant 0 : index
    %c512 = arith.constant 512 : index
    %198 = vector.load %arg4[%c0_51, %c0_52, %c512] : memref<2x8x1024xf32, #tpu.memory_space<vmem>>, vector<2x8x256xf32>
    tpu.vector_store %arg4[%c0_51, %c0_52, %c512], %197 {strides = array<i32>} : memref<2x8x1024xf32, #tpu.memory_space<vmem>>, vector<2x8x256xf32>,
    %cst_53 = arith.constant dense<0.000000e+00> : vector<8xf32>
    %199 = vector.multi_reduction <add>, %197, %cst_53 [0, 2] : vector<2x8x256xf32> to vector<8xf32>
    %200 = vector.shape_cast %199 : vector<8xf32> to vector<1x8x1xf32>
    %201 = arith.addf %141, %200 : vector<1x8x1xf32>
    %202 = arith.mulf %197, %197 : vector<2x8x256xf32>
    %cst_54 = arith.constant dense<0.000000e+00> : vector<8xf32>
    %203 = vector.multi_reduction <add>, %202, %cst_54 [0, 2] : vector<2x8x256xf32> to vector<8xf32>
    %204 = vector.shape_cast %203 : vector<8xf32> to vector<1x8x1xf32>
    %205 = arith.addf %145, %204 : vector<1x8x1xf32>
    %cst_55 = arith.constant 0.000000e+00 : f32
    %206 = vector.broadcast %cst_55 : f32 to vector<2x8x256xf32>
    %c0_56 = arith.constant 0 : index
    %c0_57 = arith.constant 0 : index
    %207 = vector.load %arg2[%c0_56, %c0_57] : memref<8x36xf32, #tpu.memory_space<vmem>>, vector<8x1xf32>
    %208 = vector.shape_cast %207 : vector<8x1xf32> to vector<1x8x1xf32>
    %209 = vector.broadcast %41 : vector<2x1x256xf32> to vector<2x8x256xf32>
    %210 = vector.broadcast %208 : vector<1x8x1xf32> to vector<2x8x256xf32>
    %211 = arith.mulf %209, %210 : vector<2x8x256xf32>
    %212 = arith.addf %206, %211 : vector<2x8x256xf32>
    %c0_58 = arith.constant 0 : index
    %c1_59 = arith.constant 1 : index
    %213 = vector.load %arg2[%c0_58, %c1_59] : memref<8x36xf32, #tpu.memory_space<vmem>>, vector<8x1xf32>
    %214 = vector.shape_cast %213 : vector<8x1xf32> to vector<1x8x1xf32>
    %215 = vector.broadcast %42 : vector<2x1x256xf32> to vector<2x8x256xf32>
    %216 = vector.broadcast %214 : vector<1x8x1xf32> to vector<2x8x256xf32>
    %217 = arith.mulf %215, %216 : vector<2x8x256xf32>
    %218 = arith.addf %212, %217 : vector<2x8x256xf32>
    %c0_60 = arith.constant 0 : index
    %c2_61 = arith.constant 2 : index
    %219 = vector.load %arg2[%c0_60, %c2_61] : memref<8x36xf32, #tpu.memory_space<vmem>>, vector<8x1xf32>
    %220 = vector.shape_cast %219 : vector<8x1xf32> to vector<1x8x1xf32>
    %221 = vector.broadcast %43 : vector<2x1x256xf32> to vector<2x8x256xf32>
    %222 = vector.broadcast %220 : vector<1x8x1xf32> to vector<2x8x256xf32>
    %223 = arith.mulf %221, %222 : vector<2x8x256xf32>
    %224 = arith.addf %218, %223 : vector<2x8x256xf32>
    %c0_62 = arith.constant 0 : index
    %c3 = arith.constant 3 : index
    %225 = vector.load %arg2[%c0_62, %c3] : memref<8x36xf32, #tpu.memory_space<vmem>>, vector<8x1xf32>
    %226 = vector.shape_cast %225 : vector<8x1xf32> to vector<1x8x1xf32>
    %227 = vector.broadcast %44 : vector<2x1x256xf32> to vector<2x8x256xf32>
    %228 = vector.broadcast %226 : vector<1x8x1xf32> to vector<2x8x256xf32>
    %229 = arith.mulf %227, %228 : vector<2x8x256xf32>
    %230 = arith.addf %224, %229 : vector<2x8x256xf32>
    %c0_63 = arith.constant 0 : index
    %c8 = arith.constant 8 : index
    %231 = vector.load %arg2[%c0_63, %c8] : memref<8x36xf32, #tpu.memory_space<vmem>>, vector<8x1xf32>
    %232 = vector.shape_cast %231 : vector<8x1xf32> to vector<1x8x1xf32>
    %233 = vector.broadcast %37 : vector<2x1x256xf32> to vector<2x8x256xf32>
    %234 = vector.broadcast %232 : vector<1x8x1xf32> to vector<2x8x256xf32>
    %235 = arith.mulf %233, %234 : vector<2x8x256xf32>
    %236 = arith.addf %230, %235 : vector<2x8x256xf32>
    %c0_64 = arith.constant 0 : index
    %c9 = arith.constant 9 : index
    %237 = vector.load %arg2[%c0_64, %c9] : memref<8x36xf32, #tpu.memory_space<vmem>>, vector<8x1xf32>
    %238 = vector.shape_cast %237 : vector<8x1xf32> to vector<1x8x1xf32>
    %239 = vector.broadcast %38 : vector<2x1x256xf32> to vector<2x8x256xf32>
    %240 = vector.broadcast %238 : vector<1x8x1xf32> to vector<2x8x256xf32>
    %241 = arith.mulf %239, %240 : vector<2x8x256xf32>
    %242 = arith.addf %236, %241 : vector<2x8x256xf32>
    %c0_65 = arith.constant 0 : index
    %c10 = arith.constant 10 : index
    %243 = vector.load %arg2[%c0_65, %c10] : memref<8x36xf32, #tpu.memory_space<vmem>>, vector<8x1xf32>
    %244 = vector.shape_cast %243 : vector<8x1xf32> to vector<1x8x1xf32>
    %245 = vector.broadcast %39 : vector<2x1x256xf32> to vector<2x8x256xf32>
    %246 = vector.broadcast %244 : vector<1x8x1xf32> to vector<2x8x256xf32>
    %247 = arith.mulf %245, %246 : vector<2x8x256xf32>
    %248 = arith.addf %242, %247 : vector<2x8x256xf32>
    %c0_66 = arith.constant 0 : index
    %c11 = arith.constant 11 : index
    %249 = vector.load %arg2[%c0_66, %c11] : memref<8x36xf32, #tpu.memory_space<vmem>>, vector<8x1xf32>
    %250 = vector.shape_cast %249 : vector<8x1xf32> to vector<1x8x1xf32>
    %251 = vector.broadcast %40 : vector<2x1x256xf32> to vector<2x8x256xf32>
    %252 = vector.broadcast %250 : vector<1x8x1xf32> to vector<2x8x256xf32>
    %253 = arith.mulf %251, %252 : vector<2x8x256xf32>
    %254 = arith.addf %248, %253 : vector<2x8x256xf32>
    %c0_67 = arith.constant 0 : index
    %c24 = arith.constant 24 : index
    %255 = vector.load %arg2[%c0_67, %c24] : memref<8x36xf32, #tpu.memory_space<vmem>>, vector<8x1xf32>
    %256 = vector.shape_cast %255 : vector<8x1xf32> to vector<1x8x1xf32>
    %257 = vector.broadcast %33 : vector<2x1x256xf32> to vector<2x8x256xf32>
    %258 = vector.broadcast %256 : vector<1x8x1xf32> to vector<2x8x256xf32>
    %259 = arith.mulf %257, %258 : vector<2x8x256xf32>
    %260 = arith.addf %254, %259 : vector<2x8x256xf32>
    %c0_68 = arith.constant 0 : index
    %c25 = arith.constant 25 : index
    %261 = vector.load %arg2[%c0_68, %c25] : memref<8x36xf32, #tpu.memory_space<vmem>>, vector<8x1xf32>
    %262 = vector.shape_cast %261 : vector<8x1xf32> to vector<1x8x1xf32>
    %263 = vector.broadcast %34 : vector<2x1x256xf32> to vector<2x8x256xf32>
    %264 = vector.broadcast %262 : vector<1x8x1xf32> to vector<2x8x256xf32>
    %265 = arith.mulf %263, %264 : vector<2x8x256xf32>
    %266 = arith.addf %260, %265 : vector<2x8x256xf32>
    %c0_69 = arith.constant 0 : index
    %c26 = arith.constant 26 : index
    %267 = vector.load %arg2[%c0_69, %c26] : memref<8x36xf32, #tpu.memory_space<vmem>>, vector<8x1xf32>
    %268 = vector.shape_cast %267 : vector<8x1xf32> to vector<1x8x1xf32>
    %269 = vector.broadcast %35 : vector<2x1x256xf32> to vector<2x8x256xf32>
    %270 = vector.broadcast %268 : vector<1x8x1xf32> to vector<2x8x256xf32>
    %271 = arith.mulf %269, %270 : vector<2x8x256xf32>
    %272 = arith.addf %266, %271 : vector<2x8x256xf32>
    %c0_70 = arith.constant 0 : index
    %c27 = arith.constant 27 : index
    %273 = vector.load %arg2[%c0_70, %c27] : memref<8x36xf32, #tpu.memory_space<vmem>>, vector<8x1xf32>
    %274 = vector.shape_cast %273 : vector<8x1xf32> to vector<1x8x1xf32>
    %275 = vector.broadcast %36 : vector<2x1x256xf32> to vector<2x8x256xf32>
    %276 = vector.broadcast %274 : vector<1x8x1xf32> to vector<2x8x256xf32>
    %277 = arith.mulf %275, %276 : vector<2x8x256xf32>
    %278 = arith.addf %272, %277 : vector<2x8x256xf32>
    %c0_71 = arith.constant 0 : index
    %c32 = arith.constant 32 : index
    %279 = vector.load %arg2[%c0_71, %c32] : memref<8x36xf32, #tpu.memory_space<vmem>>, vector<8x1xf32>
    %280 = vector.shape_cast %279 : vector<8x1xf32> to vector<1x8x1xf32>
    %281 = vector.broadcast %29 : vector<2x1x256xf32> to vector<2x8x256xf32>
    %282 = vector.broadcast %280 : vector<1x8x1xf32> to vector<2x8x256xf32>
    %283 = arith.mulf %281, %282 : vector<2x8x256xf32>
    %284 = arith.addf %278, %283 : vector<2x8x256xf32>
    %c0_72 = arith.constant 0 : index
    %c33 = arith.constant 33 : index
    %285 = vector.load %arg2[%c0_72, %c33] : memref<8x36xf32, #tpu.memory_space<vmem>>, vector<8x1xf32>
    %286 = vector.shape_cast %285 : vector<8x1xf32> to vector<1x8x1xf32>
    %287 = vector.broadcast %30 : vector<2x1x256xf32> to vector<2x8x256xf32>
    %288 = vector.broadcast %286 : vector<1x8x1xf32> to vector<2x8x256xf32>
    %289 = arith.mulf %287, %288 : vector<2x8x256xf32>
    %290 = arith.addf %284, %289 : vector<2x8x256xf32>
    %c0_73 = arith.constant 0 : index
    %c34 = arith.constant 34 : index
    %291 = vector.load %arg2[%c0_73, %c34] : memref<8x36xf32, #tpu.memory_space<vmem>>, vector<8x1xf32>
    %292 = vector.shape_cast %291 : vector<8x1xf32> to vector<1x8x1xf32>
    %293 = vector.broadcast %31 : vector<2x1x256xf32> to vector<2x8x256xf32>
    %294 = vector.broadcast %292 : vector<1x8x1xf32> to vector<2x8x256xf32>
    %295 = arith.mulf %293, %294 : vector<2x8x256xf32>
    %296 = arith.addf %290, %295 : vector<2x8x256xf32>
    %c0_74 = arith.constant 0 : index
    %c35 = arith.constant 35 : index
    %297 = vector.load %arg2[%c0_74, %c35] : memref<8x36xf32, #tpu.memory_space<vmem>>, vector<8x1xf32>
    %298 = vector.shape_cast %297 : vector<8x1xf32> to vector<1x8x1xf32>
    %299 = vector.broadcast %32 : vector<2x1x256xf32> to vector<2x8x256xf32>
    %300 = vector.broadcast %298 : vector<1x8x1xf32> to vector<2x8x256xf32>
    %301 = arith.mulf %299, %300 : vector<2x8x256xf32>
    %302 = arith.addf %296, %301 : vector<2x8x256xf32>
    %303 = vector.shape_cast %45 : vector<8x1xf32> to vector<1x8x1xf32>
    %304 = vector.broadcast %303 : vector<1x8x1xf32> to vector<2x8x256xf32>
    %305 = arith.addf %302, %304 : vector<2x8x256xf32>
    %c0_75 = arith.constant 0 : index
    %c0_76 = arith.constant 0 : index
    %c768 = arith.constant 768 : index
    %306 = vector.load %arg4[%c0_75, %c0_76, %c768] : memref<2x8x1024xf32, #tpu.memory_space<vmem>>, vector<2x8x256xf32>
    tpu.vector_store %arg4[%c0_75, %c0_76, %c768], %305 {strides = array<i32>} : memref<2x8x1024xf32, #tpu.memory_space<vmem>>, vector<2x8x256xf32>,
    %cst_77 = arith.constant dense<0.000000e+00> : vector<8xf32>
    %307 = vector.multi_reduction <add>, %305, %cst_77 [0, 2] : vector<2x8x256xf32> to vector<8xf32>
    %308 = vector.shape_cast %307 : vector<8xf32> to vector<1x8x1xf32>
    %309 = arith.addf %201, %308 : vector<1x8x1xf32>
    %310 = arith.mulf %305, %305 : vector<2x8x256xf32>
    %cst_78 = arith.constant dense<0.000000e+00> : vector<8xf32>
    %311 = vector.multi_reduction <add>, %310, %cst_78 [0, 2] : vector<2x8x256xf32> to vector<8xf32>
    %312 = vector.shape_cast %311 : vector<8xf32> to vector<1x8x1xf32>
    %313 = arith.addf %205, %312 : vector<1x8x1xf32>
    %cst_79 = arith.constant 4.8828125E-4 : f32
    %314 = vector.broadcast %cst_79 : f32 to vector<1x8x1xf32>
    %315 = arith.mulf %309, %314 : vector<1x8x1xf32>
    %cst_80 = arith.constant 4.8828125E-4 : f32
    %316 = vector.broadcast %cst_80 : f32 to vector<1x8x1xf32>
    %317 = arith.mulf %313, %316 : vector<1x8x1xf32>
    %318 = arith.mulf %315, %315 : vector<1x8x1xf32>
    %319 = arith.subf %317, %318 : vector<1x8x1xf32>
    %cst_81 = arith.constant 1.000000e-03 : f32
    %320 = vector.broadcast %cst_81 : f32 to vector<1x8x1xf32>
    %321 = arith.addf %319, %320 : vector<1x8x1xf32>
    %322 = math.rsqrt %321 : vector<1x8x1xf32>
    %323 = vector.shape_cast %46 : vector<8x1xf32> to vector<1x8x1xf32>
    %324 = arith.mulf %323, %322 : vector<1x8x1xf32>
    %325 = arith.mulf %315, %324 : vector<1x8x1xf32>
    %326 = vector.shape_cast %47 : vector<8x1xf32> to vector<1x8x1xf32>
    %327 = arith.subf %326, %325 : vector<1x8x1xf32>
    %c0_82 = arith.constant 0 : index
    %c0_83 = arith.constant 0 : index
    %c0_84 = arith.constant 0 : index
    %328 = vector.load %arg4[%c0_82, %c0_83, %c0_84] : memref<2x8x1024xf32, #tpu.memory_space<vmem>>, vector<2x8x256xf32>
    %329 = vector.broadcast %324 : vector<1x8x1xf32> to vector<2x8x256xf32>
    %330 = arith.mulf %328, %329 : vector<2x8x256xf32>
    %331 = vector.broadcast %327 : vector<1x8x1xf32> to vector<2x8x256xf32>
    %332 = arith.addf %330, %331 : vector<2x8x256xf32>
    %cst_85 = arith.constant 0.000000e+00 : f32
    %333 = vector.broadcast %cst_85 : f32 to vector<2x8x256xf32>
    %334 = arith.maximumf %332, %333 : vector<2x8x256xf32>
    %c0_86 = arith.constant 0 : index
    %c0_87 = arith.constant 0 : index
    %c0_88 = arith.constant 0 : index
    %335 = vector.load %arg4[%c0_86, %c0_87, %c0_88] : memref<2x8x1024xf32, #tpu.memory_space<vmem>>, vector<2x8x256xf32>
    tpu.vector_store %arg4[%c0_86, %c0_87, %c0_88], %334 {strides = array<i32>} : memref<2x8x1024xf32, #tpu.memory_space<vmem>>, vector<2x8x256xf32>,
    %c0_89 = arith.constant 0 : index
    %c0_90 = arith.constant 0 : index
    %c256_91 = arith.constant 256 : index
    %336 = vector.load %arg4[%c0_89, %c0_90, %c256_91] : memref<2x8x1024xf32, #tpu.memory_space<vmem>>, vector<2x8x256xf32>
    %337 = vector.broadcast %324 : vector<1x8x1xf32> to vector<2x8x256xf32>
    %338 = arith.mulf %336, %337 : vector<2x8x256xf32>
    %339 = vector.broadcast %327 : vector<1x8x1xf32> to vector<2x8x256xf32>
    %340 = arith.addf %338, %339 : vector<2x8x256xf32>
    %cst_92 = arith.constant 0.000000e+00 : f32
    %341 = vector.broadcast %cst_92 : f32 to vector<2x8x256xf32>
    %342 = arith.maximumf %340, %341 : vector<2x8x256xf32>
    %c0_93 = arith.constant 0 : index
    %c0_94 = arith.constant 0 : index
    %c256_95 = arith.constant 256 : index
    %343 = vector.load %arg4[%c0_93, %c0_94, %c256_95] : memref<2x8x1024xf32, #tpu.memory_space<vmem>>, vector<2x8x256xf32>
    tpu.vector_store %arg4[%c0_93, %c0_94, %c256_95], %342 {strides = array<i32>} : memref<2x8x1024xf32, #tpu.memory_space<vmem>>, vector<2x8x256xf32>,
    %c0_96 = arith.constant 0 : index
    %c0_97 = arith.constant 0 : index
    %c512_98 = arith.constant 512 : index
    %344 = vector.load %arg4[%c0_96, %c0_97, %c512_98] : memref<2x8x1024xf32, #tpu.memory_space<vmem>>, vector<2x8x256xf32>
    %345 = vector.broadcast %324 : vector<1x8x1xf32> to vector<2x8x256xf32>
    %346 = arith.mulf %344, %345 : vector<2x8x256xf32>
    %347 = vector.broadcast %327 : vector<1x8x1xf32> to vector<2x8x256xf32>
    %348 = arith.addf %346, %347 : vector<2x8x256xf32>
    %cst_99 = arith.constant 0.000000e+00 : f32
    %349 = vector.broadcast %cst_99 : f32 to vector<2x8x256xf32>
    %350 = arith.maximumf %348, %349 : vector<2x8x256xf32>
    %c0_100 = arith.constant 0 : index
    %c0_101 = arith.constant 0 : index
    %c512_102 = arith.constant 512 : index
    %351 = vector.load %arg4[%c0_100, %c0_101, %c512_102] : memref<2x8x1024xf32, #tpu.memory_space<vmem>>, vector<2x8x256xf32>
    tpu.vector_store %arg4[%c0_100, %c0_101, %c512_102], %350 {strides = array<i32>} : memref<2x8x1024xf32, #tpu.memory_space<vmem>>, vector<2x8x256xf32>,
    %c0_103 = arith.constant 0 : index
    %c0_104 = arith.constant 0 : index
    %c768_105 = arith.constant 768 : index
    %352 = vector.load %arg4[%c0_103, %c0_104, %c768_105] : memref<2x8x1024xf32, #tpu.memory_space<vmem>>, vector<2x8x256xf32>
    %353 = vector.broadcast %324 : vector<1x8x1xf32> to vector<2x8x256xf32>
    %354 = arith.mulf %352, %353 : vector<2x8x256xf32>
    %355 = vector.broadcast %327 : vector<1x8x1xf32> to vector<2x8x256xf32>
    %356 = arith.addf %354, %355 : vector<2x8x256xf32>
    %cst_106 = arith.constant 0.000000e+00 : f32
    %357 = vector.broadcast %cst_106 : f32 to vector<2x8x256xf32>
    %358 = arith.maximumf %356, %357 : vector<2x8x256xf32>
    %c0_107 = arith.constant 0 : index
    %c0_108 = arith.constant 0 : index
    %c768_109 = arith.constant 768 : index
    %359 = vector.load %arg4[%c0_107, %c0_108, %c768_109] : memref<2x8x1024xf32, #tpu.memory_space<vmem>>, vector<2x8x256xf32>
    tpu.vector_store %arg4[%c0_107, %c0_108, %c768_109], %358 {strides = array<i32>} : memref<2x8x1024xf32, #tpu.memory_space<vmem>>, vector<2x8x256xf32>,
    return
  }
  func.func @transform_0(%arg0: i32) -> (i32, i32, i32) {
    %c0_i32 = arith.constant 0 : i32
    %c0_i32_0 = arith.constant 0 : i32
    %c0_i32_1 = arith.constant 0 : i32
    %c0_i32_2 = arith.constant 0 : i32
    return %c0_i32, %c0_i32_0, %c0_i32_1 : i32, i32, i32
  }
  func.func @transform_1(%arg0: i32) -> (i32, i32) {
    %c0_i32 = arith.constant 0 : i32
    %c0_i32_0 = arith.constant 0 : i32
    %c0_i32_1 = arith.constant 0 : i32
    return %c0_i32, %c0_i32_0 : i32, i32
  }
  func.func @transform_2(%arg0: i32) -> (i32, i32) {
    %c0_i32 = arith.constant 0 : i32
    %c0_i32_0 = arith.constant 0 : i32
    %c0_i32_1 = arith.constant 0 : i32
    return %c0_i32, %c0_i32_0 : i32, i32
  }
  func.func @transform_3(%arg0: i32) -> (i32, i32, i32) {
    %c0_i32 = arith.constant 0 : i32
    %c0_i32_0 = arith.constant 0 : i32
    %c0_i32_1 = arith.constant 0 : i32
    %c0_i32_2 = arith.constant 0 : i32
    return %c0_i32, %c0_i32_0, %c0_i32_1 : i32, i32, i32
  }
}

</mosaic_0001>

<llo_original>
// kernel: tpu_custom_call.1
$region0: #{tpu_custom_call.1}
  #allocation0 [shape = 'u32[]', space=smem, size = 0x4, offset = 0x4, fixed_abs, tag = 'smem constant byte address 0x4 - core index']
  #allocation1 [shape = 'u32[72,128]{1,0:T(1,128)}', space=vmem, size = 0x9000, scoped, tag = 'internal scratch']
  %s0 = inlined_call_operand.hbm [shape: f32[2,4,273], index: 0, kind: input, shape index: {}]
  %s1 = inlined_call_operand.vmem [shape: f32[8,36], index: 1, kind: input, shape index: {}]
  %s2 = inlined_call_operand.vmem [shape: f32[8,3], index: 2, kind: input, shape index: {}]
  %s3 = inlined_call_operand.hbm [shape: f32[2,8,1024], index: 3, kind: output, shape index: {}]
  %s4 = sld [smem:[#allocation0]]
  $region26: #{tpu_custom_call.1} parent=0
    _
  %s6 = ssub.s32 1, %s4
  %s7 = scalar_select 0, %s6, %s4
  $region1: #{tpu_custom_call.1} parent=0
    #allocation2 [shape = 'u8[12288]{0}', space=vmem, size = 0x3000, scoped, tag = 'input window, operand 0, single buffered']
    #allocation3 [shape = 's32[1]{0}', space=sflag, size = 0x4, scoped, tag = 'scoped memory for tpu_custom_call.1']
    #allocation4 [shape = 's32[1]{0}', space=sflag, size = 0x4, scoped, tag = 'scoped memory for tpu_custom_call.1']
    #allocation5 [shape = 'u8[65536]{0}', space=vmem, size = 0x10000, scoped, tag = 'output window, operand 0, single buffered']
    %8 = vsyncpa [#allocation3], 0
    %9 = vsyncpa [#allocation4], 0
    // Predicated region
    $region2: #{tpu_custom_call.1} parent=1 // pred_check
      _
    $region3: #{tpu_custom_call.1} parent=1 // pred_check_branch
      %11 = sbr.rel (0) target = $region5
    $region4: #{tpu_custom_call.1} parent=1 // pred_region
      %13 = vsyncadd [#allocation3], 0
      %s14 = sshll.u32 %s0, 4
      %s15 = int_to_ptr.hbm [resolvable:$true] %s14
      %s16 = sshll.u32 [#allocation2], 4
      %s17 = int_to_ptr.vmem [resolvable:$true] %s16
      %22 = dma.hbm_to_vmem [thread:$0]  %s15, 384, %s17, [#allocation3], 192, 192, 12
    $region5: #{tpu_custom_call.1} parent=1 // pred_fallthru
      _
    // Predicated region
    $region6: #{tpu_custom_call.1} parent=1 // pred_check
      _
    $region7: #{tpu_custom_call.1} parent=1 // pred_check_branch
      %24 = sbr.rel (0) target = $region9
    $region8: #{tpu_custom_call.1} parent=1 // pred_region
      _
    $region9: #{tpu_custom_call.1} parent=1 // pred_fallthru
      _
    // Predicated region
    $region10: #{tpu_custom_call.1} parent=1 // pred_check
      _
    $region11: #{tpu_custom_call.1} parent=1 // pred_check_branch
      %26 = sbr.rel (0) target = $region13
    $region12: #{tpu_custom_call.1} parent=1 // pred_region
      _
    $region13: #{tpu_custom_call.1} parent=1 // pred_fallthru
      _
    // Predicated region
    $region14: #{tpu_custom_call.1} parent=1 // pred_check
      _
    $region15: #{tpu_custom_call.1} parent=1 // pred_check_branch
      %28 = sbr.rel (0) target = $region17
    $region16: #{tpu_custom_call.1} parent=1 // pred_region
      %30 = dma.done [#allocation3], 384
    $region17: #{tpu_custom_call.1} parent=1 // pred_fallthru
      _
    %v31 = vlaneseq
    %v32 = vand.u32 %v31, 127
    %v33 = vadd.s32 %v32, 128
    %vm34 = vcmp.lt.s32.totalorder %v32, 0
    %v35 = vsub.s32 0, %v32
    %v36 = vsel %vm34, %v35, %v32
    %v37 = vshrl.u32 %v36, 4
    %v38 = vand.u32 %v36, 15
    %v39 = vsub.s32 0, %v38
    %v40 = vsel %vm34, %v39, %v38
    %vm41 = vcmp.lt.s32.totalorder %v33, 0
    %v42 = vsub.s32 0, %v33
    %v43 = vsel %vm41, %v42, %v33
    %v44 = vshrl.u32 %v43, 4
    %v45 = vand.u32 %v43, 15
    %v46 = vsub.s32 0, %v45
    %v47 = vsel %vm41, %v46, %v45
    %vm48 = vcmp.ne.s32.totalorder %v40, 0
    %vm49 = vcmp.ne.s32.totalorder %v47, 0
    %vm50 = vcmp.lt.s32.totalorder %v40, 0
    %vm51 = vcmp.lt.s32.totalorder %v47, 0
    %vm52 = vmand %vm50, %vm48
    %vm53 = vmand %vm51, %vm49
    %v54 = vadd.s32 %v40, 16
    %v55 = vadd.s32 %v47, 16
    %v56 = vsel %vm52, %v54, %v40
    %v57 = vsel %vm53, %v55, %v47
    %vm58 = vcmp.lt.s32.totalorder %v56, 15
    %vm59 = vcmp.lt.s32.totalorder %v57, 15
    %v60 = vsel %vm58, 1, 0
    %v61 = vsel %vm59, 1, 0
    %v62 = vcvt.s32.f32 %v60
    %v63 = vcvt.s32.f32 %v61
    %v64 = vld [vmem:[#allocation2] sm:$0xff]
    %v65 = vld [vmem:[#allocation2 + $0xc] sm:$0xff]
    %v66 = vld [vmem:[#allocation2 + $0x8] sm:$0xf]
    %v67 = vld [vmem:[#allocation2 + $0x14] sm:$0xf]
    %v70 = vrot.slane %v63, 4
    %vm71 = vcmask 1043456
    %v72 = vsel %vm71, %v62, %v70
    %73 = vrot.lane.b32.xlu0 %v72, 1
    %v74 = vpop.permute.xlu0 %73
    %v75 = vrot.slane %v74, 4
    %vm76 = vcmask 7168
    %v77 = vsel %vm76, %v75, %v74
    %v80 = vmul.f32 %v64, %v77
    %v81 = vmul.f32 %v66, %v75
    %v82 = vmul.f32 %v65, %v77
    %v83 = vmul.f32 %v67, %v75
    %84 = vrot.lane.b32.xlu0 %v72, 17
    %v85 = vpop.permute.xlu0 %84
    %v86 = vrot.slane %v85, 4
    %vm87 = vcmask 138240
    %v88 = vsel %vm87, %v86, %v85
    %v91 = vmul.f32 %v64, %v88
    %v92 = vmul.f32 %v66, %v86
    %v93 = vmul.f32 %v65, %v88
    %v94 = vmul.f32 %v67, %v86
    %v95 = vld [vmem:[%s2] sm:$0xff]
    %v96 = vld [vmem:[%s1] sm:$0xff]
    %v99 = vperm.slane %v64, 0
    %v100 = vperm.slane %v64, 4
    %v101 = vperm.slane %v65, 0
    %v102 = vperm.slane %v65, 4
    %v107 = vperm.slane %v99, 0
    %v108 = vperm.slane %v100, 0
    %v109 = vperm.slane %v101, 0
    %v110 = vperm.slane %v102, 0
    %112 = vset.pattern.permute.xlu0 16
    %113 = vperm.xlu0 %112, %v96
    %v114 = vpop.permute.xlu0 %113
    %v116 = vmul.f32 %v107, %v114
    %v117 = vmul.f32 %v108, %v114
    %v118 = vmul.f32 %v109, %v114
    %v119 = vmul.f32 %v110, %v114
    %v120 = vadd.f32 %v116, 0.0
    %v121 = vadd.f32 %v117, 0.0
    %v122 = vadd.f32 %v118, 0.0
    %v123 = vadd.f32 %v119, 0.0
    %v124 = vperm.slane %v64, 1
    %v125 = vperm.slane %v64, 5
    %v126 = vperm.slane %v65, 1
    %v127 = vperm.slane %v65, 5
    %v132 = vperm.slane %v124, 1
    %v133 = vperm.slane %v125, 1
    %v134 = vperm.slane %v126, 1
    %v135 = vperm.slane %v127, 1
    %136 = vset.pattern.permute.xlu0 17
    %137 = vperm.xlu0 %136, %v96
    %v138 = vpop.permute.xlu0 %137
    %v140 = vmul.f32 %v132, %v138
    %v141 = vmul.f32 %v133, %v138
    %v142 = vmul.f32 %v134, %v138
    %v143 = vmul.f32 %v135, %v138
    %v144 = vadd.f32 %v120, %v140
    %v145 = vadd.f32 %v121, %v141
    %v146 = vadd.f32 %v122, %v142
    %v147 = vadd.f32 %v123, %v143
    %v148 = vperm.slane %v64, 2
    %v149 = vperm.slane %v64, 6
    %v150 = vperm.slane %v65, 2
    %v151 = vperm.slane %v65, 6
    %v156 = vperm.slane %v148, 2
    %v157 = vperm.slane %v149, 2
    %v158 = vperm.slane %v150, 2
    %v159 = vperm.slane %v151, 2
    %160 = vset.pattern.permute.xlu0 18
    %161 = vperm.xlu0 %160, %v96
    %v162 = vpop.permute.xlu0 %161
    %v164 = vmul.f32 %v156, %v162
    %v165 = vmul.f32 %v157, %v162
    %v166 = vmul.f32 %v158, %v162
    %v167 = vmul.f32 %v159, %v162
    %v168 = vadd.f32 %v144, %v164
    %v169 = vadd.f32 %v145, %v165
    %v170 = vadd.f32 %v146, %v166
    %v171 = vadd.f32 %v147, %v167
    %v172 = vperm.slane %v64, 3
    %v173 = vperm.slane %v64, 7
    %v174 = vperm.slane %v65, 3
    %v175 = vperm.slane %v65, 7
    %v180 = vperm.slane %v172, 3
    %v181 = vperm.slane %v173, 3
    %v182 = vperm.slane %v174, 3
    %v183 = vperm.slane %v175, 3
    %184 = vset.pattern.permute.xlu0 19
    %185 = vperm.xlu0 %184, %v96
    %v186 = vpop.permute.xlu0 %185
    %v188 = vmul.f32 %v180, %v186
    %v189 = vmul.f32 %v181, %v186
    %v190 = vmul.f32 %v182, %v186
    %v191 = vmul.f32 %v183, %v186
    %v192 = vadd.f32 %v168, %v188
    %v193 = vadd.f32 %v169, %v189
    %v194 = vadd.f32 %v170, %v190
    %v195 = vadd.f32 %v171, %v191
    %197 = vset.pattern.permute.xlu0 0
    %198 = vperm.xlu0 %197, %v95
    %v199 = vpop.permute.xlu0 %198
    %v201 = vadd.f32 %v192, %v199
    %v202 = vadd.f32 %v193, %v199
    %v203 = vadd.f32 %v194, %v199
    %v204 = vadd.f32 %v195, %v199
    %205 = vst [vmem:[#allocation5] sm:$0xff] %v201
    %206 = vst [vmem:[#allocation5 + $0x8] sm:$0xff] %v202
    %207 = vst [vmem:[#allocation5 + $0x40] sm:$0xff] %v203
    %208 = vst [vmem:[#allocation5 + $0x48] sm:$0xff] %v204
    %v209 = vadd.f32 %v201, %v202
    %v210 = vadd.f32 %v209, %v203
    %v211 = vadd.f32 %v210, %v204
    %212 = vadd.xlane.f32.xlu0 %v211
    %v213 = vpop.xlane.xlu0 %212
    %v214 = vadd.f32 %v213, 0.0
    %v215 = vmul.f32 %v201, %v201
    %v216 = vmul.f32 %v202, %v202
    %v217 = vmul.f32 %v203, %v203
    %v218 = vmul.f32 %v204, %v204
    %v219 = vadd.f32 %v215, %v216
    %v220 = vadd.f32 %v219, %v217
    %v221 = vadd.f32 %v220, %v218
    %222 = vadd.xlane.f32.xlu0 %v221
    %v223 = vpop.xlane.xlu0 %222
    %v224 = vadd.f32 %v223, 0.0
    %v225 = vld [vmem:[%s1] sm:$0xff]
    %v230 = vperm.slane %v80, 0
    %v231 = vperm.slane %v80, 4
    %v232 = vperm.slane %v81, 0
    %v233 = vperm.slane %v82, 0
    %v234 = vperm.slane %v82, 4
    %v235 = vperm.slane %v83, 0
    %v242 = vperm.slane %v230, 0
    %v243 = vperm.slane %v231, 0
    %v244 = vperm.slane %v232, 0
    %v245 = vperm.slane %v233, 0
    %v246 = vperm.slane %v234, 0
    %v247 = vperm.slane %v235, 0
    %249 = vset.pattern.permute.xlu0 12
    %250 = vperm.xlu0 %249, %v225
    %v251 = vpop.permute.xlu0 %250
    %v253 = vmul.f32 %v242, %v251
    %v254 = vmul.f32 %v243, %v251
    %v255 = vmul.f32 %v244, %v251
    %v256 = vmul.f32 %v245, %v251
    %v257 = vmul.f32 %v246, %v251
    %v258 = vmul.f32 %v247, %v251
    %v259 = vadd.f32 %v253, 0.0
    %v260 = vadd.f32 %v254, 0.0
    %v261 = vadd.f32 %v255, 0.0
    %v262 = vadd.f32 %v256, 0.0
    %v263 = vadd.f32 %v257, 0.0
    %v264 = vadd.f32 %v258, 0.0
    %v265 = vperm.slane %v80, 1
    %v266 = vperm.slane %v80, 5
    %v267 = vperm.slane %v81, 1
    %v268 = vperm.slane %v82, 1
    %v269 = vperm.slane %v82, 5
    %v270 = vperm.slane %v83, 1
    %v277 = vperm.slane %v265, 1
    %v278 = vperm.slane %v266, 1
    %v279 = vperm.slane %v267, 1
    %v280 = vperm.slane %v268, 1
    %v281 = vperm.slane %v269, 1
    %v282 = vperm.slane %v270, 1
    %283 = vset.pattern.permute.xlu0 13
    %284 = vperm.xlu0 %283, %v225
    %v285 = vpop.permute.xlu0 %284
    %v287 = vmul.f32 %v277, %v285
    %v288 = vmul.f32 %v278, %v285
    %v289 = vmul.f32 %v279, %v285
    %v290 = vmul.f32 %v280, %v285
    %v291 = vmul.f32 %v281, %v285
    %v292 = vmul.f32 %v282, %v285
    %v293 = vadd.f32 %v259, %v287
    %v294 = vadd.f32 %v260, %v288
    %v295 = vadd.f32 %v261, %v289
    %v296 = vadd.f32 %v262, %v290
    %v297 = vadd.f32 %v263, %v291
    %v298 = vadd.f32 %v264, %v292
    %v299 = vperm.slane %v80, 2
    %v300 = vperm.slane %v80, 6
    %v301 = vperm.slane %v81, 2
    %v302 = vperm.slane %v82, 2
    %v303 = vperm.slane %v82, 6
    %v304 = vperm.slane %v83, 2
    %v311 = vperm.slane %v299, 2
    %v312 = vperm.slane %v300, 2
    %v313 = vperm.slane %v301, 2
    %v314 = vperm.slane %v302, 2
    %v315 = vperm.slane %v303, 2
    %v316 = vperm.slane %v304, 2
    %317 = vset.pattern.permute.xlu0 14
    %318 = vperm.xlu0 %317, %v225
    %v319 = vpop.permute.xlu0 %318
    %v321 = vmul.f32 %v311, %v319
    %v322 = vmul.f32 %v312, %v319
    %v323 = vmul.f32 %v313, %v319
    %v324 = vmul.f32 %v314, %v319
    %v325 = vmul.f32 %v315, %v319
    %v326 = vmul.f32 %v316, %v319
    %v327 = vadd.f32 %v293, %v321
    %v328 = vadd.f32 %v294, %v322
    %v329 = vadd.f32 %v295, %v323
    %v330 = vadd.f32 %v296, %v324
    %v331 = vadd.f32 %v297, %v325
    %v332 = vadd.f32 %v298, %v326
    %v333 = vperm.slane %v80, 3
    %v334 = vperm.slane %v80, 7
    %v335 = vperm.slane %v81, 3
    %v336 = vperm.slane %v82, 3
    %v337 = vperm.slane %v82, 7
    %v338 = vperm.slane %v83, 3
    %v345 = vperm.slane %v333, 3
    %v346 = vperm.slane %v334, 3
    %v347 = vperm.slane %v335, 3
    %v348 = vperm.slane %v336, 3
    %v349 = vperm.slane %v337, 3
    %v350 = vperm.slane %v338, 3
    %351 = vset.pattern.permute.xlu0 15
    %352 = vperm.xlu0 %351, %v225
    %v353 = vpop.permute.xlu0 %352
    %v355 = vmul.f32 %v345, %v353
    %v356 = vmul.f32 %v346, %v353
    %v357 = vmul.f32 %v347, %v353
    %v358 = vmul.f32 %v348, %v353
    %v359 = vmul.f32 %v349, %v353
    %v360 = vmul.f32 %v350, %v353
    %v361 = vadd.f32 %v327, %v355
    %v362 = vadd.f32 %v328, %v356
    %v363 = vadd.f32 %v329, %v357
    %v364 = vadd.f32 %v330, %v358
    %v365 = vadd.f32 %v331, %v359
    %v366 = vadd.f32 %v332, %v360
    %367 = vset.pattern.permute.xlu0 20
    %368 = vperm.xlu0 %367, %v225
    %v369 = vpop.permute.xlu0 %368
    %v371 = vmul.f32 %v107, %v369
    %v372 = vmul.f32 %v108, %v369
    %v373 = vmul.f32 %v109, %v369
    %v374 = vmul.f32 %v110, %v369
    %379 = vrot.lane.b32.xlu0 %v371, 1
    %v380 = vpop.permute.xlu0 %379
    %381 = vrot.lane.b32.xlu0 %v372, 1
    %v382 = vpop.permute.xlu0 %381
    %383 = vrot.lane.b32.xlu0 %v373, 1
    %v384 = vpop.permute.xlu0 %383
    %385 = vrot.lane.b32.xlu0 %v374, 1
    %v386 = vpop.permute.xlu0 %385
    %v387 = vsel %vm76, %v380, %v382
    %v388 = vsel %vm76, %v384, %v386
    %v395 = vadd.f32 %v361, %v380
    %v396 = vadd.f32 %v362, %v387
    %v397 = vadd.f32 %v363, %v382
    %v398 = vadd.f32 %v364, %v384
    %v399 = vadd.f32 %v365, %v388
    %v400 = vadd.f32 %v366, %v386
    %401 = vset.pattern.permute.xlu0 21
    %402 = vperm.xlu0 %401, %v225
    %v403 = vpop.permute.xlu0 %402
    %v405 = vmul.f32 %v132, %v403
    %v406 = vmul.f32 %v133, %v403
    %v407 = vmul.f32 %v134, %v403
    %v408 = vmul.f32 %v135, %v403
    %413 = vrot.lane.b32.xlu0 %v405, 1
    %v414 = vpop.permute.xlu0 %413
    %415 = vrot.lane.b32.xlu0 %v406, 1
    %v416 = vpop.permute.xlu0 %415
    %417 = vrot.lane.b32.xlu0 %v407, 1
    %v418 = vpop.permute.xlu0 %417
    %419 = vrot.lane.b32.xlu0 %v408, 1
    %v420 = vpop.permute.xlu0 %419
    %v421 = vsel %vm76, %v414, %v416
    %v422 = vsel %vm76, %v418, %v420
    %v429 = vadd.f32 %v395, %v414
    %v430 = vadd.f32 %v396, %v421
    %v431 = vadd.f32 %v397, %v416
    %v432 = vadd.f32 %v398, %v418
    %v433 = vadd.f32 %v399, %v422
    %v434 = vadd.f32 %v400, %v420
    %435 = vset.pattern.permute.xlu0 22
    %436 = vperm.xlu0 %435, %v225
    %v437 = vpop.permute.xlu0 %436
    %v439 = vmul.f32 %v156, %v437
    %v440 = vmul.f32 %v157, %v437
    %v441 = vmul.f32 %v158, %v437
    %v442 = vmul.f32 %v159, %v437
    %447 = vrot.lane.b32.xlu0 %v439, 1
    %v448 = vpop.permute.xlu0 %447
    %449 = vrot.lane.b32.xlu0 %v440, 1
    %v450 = vpop.permute.xlu0 %449
    %451 = vrot.lane.b32.xlu0 %v441, 1
    %v452 = vpop.permute.xlu0 %451
    %453 = vrot.lane.b32.xlu0 %v442, 1
    %v454 = vpop.permute.xlu0 %453
    %v455 = vsel %vm76, %v448, %v450
    %v456 = vsel %vm76, %v452, %v454
    %v463 = vadd.f32 %v429, %v448
    %v464 = vadd.f32 %v430, %v455
    %v465 = vadd.f32 %v431, %v450
    %v466 = vadd.f32 %v432, %v452
    %v467 = vadd.f32 %v433, %v456
    %v468 = vadd.f32 %v434, %v454
    %469 = vset.pattern.permute.xlu0 23
    %470 = vperm.xlu0 %469, %v225
    %v471 = vpop.permute.xlu0 %470
    %v473 = vmul.f32 %v180, %v471
    %v474 = vmul.f32 %v181, %v471
    %v475 = vmul.f32 %v182, %v471
    %v476 = vmul.f32 %v183, %v471
    %481 = vrot.lane.b32.xlu0 %v473, 1
    %v482 = vpop.permute.xlu0 %481
    %483 = vrot.lane.b32.xlu0 %v474, 1
    %v484 = vpop.permute.xlu0 %483
    %485 = vrot.lane.b32.xlu0 %v475, 1
    %v486 = vpop.permute.xlu0 %485
    %487 = vrot.lane.b32.xlu0 %v476, 1
    %v488 = vpop.permute.xlu0 %487
    %v489 = vsel %vm76, %v482, %v484
    %v490 = vsel %vm76, %v486, %v488
    %v497 = vadd.f32 %v463, %v482
    %v498 = vadd.f32 %v464, %v489
    %v499 = vadd.f32 %v465, %v484
    %v500 = vadd.f32 %v466, %v486
    %v501 = vadd.f32 %v467, %v490
    %v502 = vadd.f32 %v468, %v488
    %v503 = vadd.f32 %v497, %v199
    %v504 = vadd.f32 %v498, %v199
    %v505 = vadd.f32 %v499, %v199
    %v506 = vadd.f32 %v500, %v199
    %v507 = vadd.f32 %v501, %v199
    %v508 = vadd.f32 %v502, %v199
    %515 = vrot.lane.b32.xlu0 %v503, 127
    %v516 = vpop.permute.xlu0 %515
    %517 = vrot.lane.b32.xlu0 %v504, 127
    %v518 = vpop.permute.xlu0 %517
    %519 = vrot.lane.b32.xlu0 %v505, 127
    %v520 = vpop.permute.xlu0 %519
    %521 = vrot.lane.b32.xlu0 %v506, 127
    %v522 = vpop.permute.xlu0 %521
    %523 = vrot.lane.b32.xlu0 %v507, 127
    %v524 = vpop.permute.xlu0 %523
    %525 = vrot.lane.b32.xlu0 %v508, 127
    %v526 = vpop.permute.xlu0 %525
    %vm527 = vcmask 1039360
    %v528 = vsel %vm527, %v516, %v518
    %v529 = vsel %vm527, %v518, %v520
    %v530 = vsel %vm527, %v522, %v524
    %v531 = vsel %vm527, %v524, %v526
    %536 = vst [vmem:[#allocation5 + $0x10] sm:$0xff] %v528
    %537 = vst [vmem:[#allocation5 + $0x18] sm:$0xff] %v529
    %538 = vst [vmem:[#allocation5 + $0x50] sm:$0xff] %v530
    %539 = vst [vmem:[#allocation5 + $0x58] sm:$0xff] %v531
    %v540 = vadd.f32 %v528, %v529
    %v541 = vadd.f32 %v540, %v530
    %v542 = vadd.f32 %v541, %v531
    %543 = vadd.xlane.f32.xlu0 %v542
    %v544 = vpop.xlane.xlu0 %543
    %v545 = vadd.f32 %v214, %v544
    %v546 = vmul.f32 %v503, %v503
    %v547 = vmul.f32 %v504, %v504
    %v548 = vmul.f32 %v505, %v505
    %v549 = vmul.f32 %v506, %v506
    %v550 = vmul.f32 %v507, %v507
    %v551 = vmul.f32 %v508, %v508
    %558 = vrot.lane.b32.xlu0 %v546, 127
    %v559 = vpop.permute.xlu0 %558
    %560 = vrot.lane.b32.xlu0 %v547, 127
    %v561 = vpop.permute.xlu0 %560
    %562 = vrot.lane.b32.xlu0 %v548, 127
    %v563 = vpop.permute.xlu0 %562
    %564 = vrot.lane.b32.xlu0 %v549, 127
    %v565 = vpop.permute.xlu0 %564
    %566 = vrot.lane.b32.xlu0 %v550, 127
    %v567 = vpop.permute.xlu0 %566
    %568 = vrot.lane.b32.xlu0 %v551, 127
    %v569 = vpop.permute.xlu0 %568
    %v570 = vsel %vm527, %v559, %v561
    %v571 = vsel %vm527, %v561, %v563
    %v572 = vsel %vm527, %v565, %v567
    %v573 = vsel %vm527, %v567, %v569
    %v578 = vadd.f32 %v570, %v571
    %v579 = vadd.f32 %v578, %v572
    %v580 = vadd.f32 %v579, %v573
    %581 = vadd.xlane.f32.xlu0 %v580
    %v582 = vpop.xlane.xlu0 %581
    %v583 = vadd.f32 %v224, %v582
    %v584 = vld [vmem:[%s1] sm:$0xff]
    %v587 = vperm.slane %v66, 0
    %v588 = vperm.slane %v67, 0
    %v591 = vperm.slane %v587, 0
    %v592 = vperm.slane %v588, 0
    %594 = vset.pattern.permute.xlu0 4
    %595 = vperm.xlu0 %594, %v584
    %v596 = vpop.permute.xlu0 %595
    %v598 = vmul.f32 %v107, %v596
    %v599 = vmul.f32 %v108, %v596
    %v600 = vmul.f32 %v591, %v596
    %v601 = vmul.f32 %v109, %v596
    %v602 = vmul.f32 %v110, %v596
    %v603 = vmul.f32 %v592, %v596
    %v604 = vadd.f32 %v598, 0.0
    %v605 = vadd.f32 %v599, 0.0
    %v606 = vadd.f32 %v600, 0.0
    %v607 = vadd.f32 %v601, 0.0
    %v608 = vadd.f32 %v602, 0.0
    %v609 = vadd.f32 %v603, 0.0
    %v610 = vperm.slane %v66, 1
    %v611 = vperm.slane %v67, 1
    %v614 = vperm.slane %v610, 1
    %v615 = vperm.slane %v611, 1
    %616 = vset.pattern.permute.xlu0 5
    %617 = vperm.xlu0 %616, %v584
    %v618 = vpop.permute.xlu0 %617
    %v620 = vmul.f32 %v132, %v618
    %v621 = vmul.f32 %v133, %v618
    %v622 = vmul.f32 %v614, %v618
    %v623 = vmul.f32 %v134, %v618
    %v624 = vmul.f32 %v135, %v618
    %v625 = vmul.f32 %v615, %v618
    %v626 = vadd.f32 %v604, %v620
    %v627 = vadd.f32 %v605, %v621
    %v628 = vadd.f32 %v606, %v622
    %v629 = vadd.f32 %v607, %v623
    %v630 = vadd.f32 %v608, %v624
    %v631 = vadd.f32 %v609, %v625
    %v632 = vperm.slane %v66, 2
    %v633 = vperm.slane %v67, 2
    %v636 = vperm.slane %v632, 2
    %v637 = vperm.slane %v633, 2
    %638 = vset.pattern.permute.xlu0 6
    %639 = vperm.xlu0 %638, %v584
    %v640 = vpop.permute.xlu0 %639
    %v642 = vmul.f32 %v156, %v640
    %v643 = vmul.f32 %v157, %v640
    %v644 = vmul.f32 %v636, %v640
    %v645 = vmul.f32 %v158, %v640
    %v646 = vmul.f32 %v159, %v640
    %v647 = vmul.f32 %v637, %v640
    %v648 = vadd.f32 %v626, %v642
    %v649 = vadd.f32 %v627, %v643
    %v650 = vadd.f32 %v628, %v644
    %v651 = vadd.f32 %v629, %v645
    %v652 = vadd.f32 %v630, %v646
    %v653 = vadd.f32 %v631, %v647
    %v654 = vperm.slane %v66, 3
    %v655 = vperm.slane %v67, 3
    %v658 = vperm.slane %v654, 3
    %v659 = vperm.slane %v655, 3
    %660 = vset.pattern.permute.xlu0 7
    %661 = vperm.xlu0 %660, %v584
    %v662 = vpop.permute.xlu0 %661
    %v664 = vmul.f32 %v180, %v662
    %v665 = vmul.f32 %v181, %v662
    %v666 = vmul.f32 %v658, %v662
    %v667 = vmul.f32 %v182, %v662
    %v668 = vmul.f32 %v183, %v662
    %v669 = vmul.f32 %v659, %v662
    %v670 = vadd.f32 %v648, %v664
    %v671 = vadd.f32 %v649, %v665
    %v672 = vadd.f32 %v650, %v666
    %v673 = vadd.f32 %v651, %v667
    %v674 = vadd.f32 %v652, %v668
    %v675 = vadd.f32 %v653, %v669
    %676 = vset.pattern.permute.xlu0 28
    %677 = vperm.xlu0 %676, %v584
    %v678 = vpop.permute.xlu0 %677
    %v680 = vmul.f32 %v107, %v678
    %v681 = vmul.f32 %v108, %v678
    %v682 = vmul.f32 %v109, %v678
    %v683 = vmul.f32 %v110, %v678
    %688 = vrot.lane.b32.xlu0 %v680, 16
    %v689 = vpop.permute.xlu0 %688
    %690 = vrot.lane.b32.xlu0 %v681, 16
    %v691 = vpop.permute.xlu0 %690
    %692 = vrot.lane.b32.xlu0 %v682, 16
    %v693 = vpop.permute.xlu0 %692
    %694 = vrot.lane.b32.xlu0 %v683, 16
    %v695 = vpop.permute.xlu0 %694
    %vm696 = vcmask 130048
    %v697 = vsel %vm696, %v689, %v691
    %v698 = vsel %vm696, %v693, %v695
    %v705 = vadd.f32 %v670, %v689
    %v706 = vadd.f32 %v671, %v697
    %v707 = vadd.f32 %v672, %v691
    %v708 = vadd.f32 %v673, %v693
    %v709 = vadd.f32 %v674, %v698
    %v710 = vadd.f32 %v675, %v695
    %711 = vset.pattern.permute.xlu0 29
    %712 = vperm.xlu0 %711, %v584
    %v713 = vpop.permute.xlu0 %712
    %v715 = vmul.f32 %v132, %v713
    %v716 = vmul.f32 %v133, %v713
    %v717 = vmul.f32 %v134, %v713
    %v718 = vmul.f32 %v135, %v713
    %723 = vrot.lane.b32.xlu0 %v715, 16
    %v724 = vpop.permute.xlu0 %723
    %725 = vrot.lane.b32.xlu0 %v716, 16
    %v726 = vpop.permute.xlu0 %725
    %727 = vrot.lane.b32.xlu0 %v717, 16
    %v728 = vpop.permute.xlu0 %727
    %729 = vrot.lane.b32.xlu0 %v718, 16
    %v730 = vpop.permute.xlu0 %729
    %v731 = vsel %vm696, %v724, %v726
    %v732 = vsel %vm696, %v728, %v730
    %v739 = vadd.f32 %v705, %v724
    %v740 = vadd.f32 %v706, %v731
    %v741 = vadd.f32 %v707, %v726
    %v742 = vadd.f32 %v708, %v728
    %v743 = vadd.f32 %v709, %v732
    %v744 = vadd.f32 %v710, %v730
    %745 = vset.pattern.permute.xlu0 30
    %746 = vperm.xlu0 %745, %v584
    %v747 = vpop.permute.xlu0 %746
    %v749 = vmul.f32 %v156, %v747
    %v750 = vmul.f32 %v157, %v747
    %v751 = vmul.f32 %v158, %v747
    %v752 = vmul.f32 %v159, %v747
    %757 = vrot.lane.b32.xlu0 %v749, 16
    %v758 = vpop.permute.xlu0 %757
    %759 = vrot.lane.b32.xlu0 %v750, 16
    %v760 = vpop.permute.xlu0 %759
    %761 = vrot.lane.b32.xlu0 %v751, 16
    %v762 = vpop.permute.xlu0 %761
    %763 = vrot.lane.b32.xlu0 %v752, 16
    %v764 = vpop.permute.xlu0 %763
    %v765 = vsel %vm696, %v758, %v760
    %v766 = vsel %vm696, %v762, %v764
    %v773 = vadd.f32 %v739, %v758
    %v774 = vadd.f32 %v740, %v765
    %v775 = vadd.f32 %v741, %v760
    %v776 = vadd.f32 %v742, %v762
    %v777 = vadd.f32 %v743, %v766
    %v778 = vadd.f32 %v744, %v764
    %779 = vset.pattern.permute.xlu0 31
    %780 = vperm.xlu0 %779, %v584
    %v781 = vpop.permute.xlu0 %780
    %v783 = vmul.f32 %v180, %v781
    %v784 = vmul.f32 %v181, %v781
    %v785 = vmul.f32 %v182, %v781
    %v786 = vmul.f32 %v183, %v781
    %791 = vrot.lane.b32.xlu0 %v783, 16
    %v792 = vpop.permute.xlu0 %791
    %793 = vrot.lane.b32.xlu0 %v784, 16
    %v794 = vpop.permute.xlu0 %793
    %795 = vrot.lane.b32.xlu0 %v785, 16
    %v796 = vpop.permute.xlu0 %795
    %797 = vrot.lane.b32.xlu0 %v786, 16
    %v798 = vpop.permute.xlu0 %797
    %v799 = vsel %vm696, %v792, %v794
    %v800 = vsel %vm696, %v796, %v798
    %v807 = vadd.f32 %v773, %v792
    %v808 = vadd.f32 %v774, %v799
    %v809 = vadd.f32 %v775, %v794
    %v810 = vadd.f32 %v776, %v796
    %v811 = vadd.f32 %v777, %v800
    %v812 = vadd.f32 %v778, %v798
    %v813 = vadd.f32 %v807, %v199
    %v814 = vadd.f32 %v808, %v199
    %v815 = vadd.f32 %v809, %v199
    %v816 = vadd.f32 %v810, %v199
    %v817 = vadd.f32 %v811, %v199
    %v818 = vadd.f32 %v812, %v199
    %825 = vrot.lane.b32.xlu0 %v813, 112
    %v826 = vpop.permute.xlu0 %825
    %827 = vrot.lane.b32.xlu0 %v814, 112
    %v828 = vpop.permute.xlu0 %827
    %829 = vrot.lane.b32.xlu0 %v815, 112
    %v830 = vpop.permute.xlu0 %829
    %831 = vrot.lane.b32.xlu0 %v816, 112
    %v832 = vpop.permute.xlu0 %831
    %833 = vrot.lane.b32.xlu0 %v817, 112
    %v834 = vpop.permute.xlu0 %833
    %835 = vrot.lane.b32.xlu0 %v818, 112
    %v836 = vpop.permute.xlu0 %835
    %vm837 = vcmask 916480
    %v838 = vsel %vm837, %v826, %v828
    %v839 = vsel %vm837, %v828, %v830
    %v840 = vsel %vm837, %v832, %v834
    %v841 = vsel %vm837, %v834, %v836
    %846 = vst [vmem:[#allocation5 + $0x20] sm:$0xff] %v838
    %847 = vst [vmem:[#allocation5 + $0x28] sm:$0xff] %v839
    %848 = vst [vmem:[#allocation5 + $0x60] sm:$0xff] %v840
    %849 = vst [vmem:[#allocation5 + $0x68] sm:$0xff] %v841
    %v850 = vadd.f32 %v838, %v839
    %v851 = vadd.f32 %v850, %v840
    %v852 = vadd.f32 %v851, %v841
    %853 = vadd.xlane.f32.xlu0 %v852
    %v854 = vpop.xlane.xlu0 %853
    %v855 = vadd.f32 %v545, %v854
    %v856 = vmul.f32 %v813, %v813
    %v857 = vmul.f32 %v814, %v814
    %v858 = vmul.f32 %v815, %v815
    %v859 = vmul.f32 %v816, %v816
    %v860 = vmul.f32 %v817, %v817
    %v861 = vmul.f32 %v818, %v818
    %868 = vrot.lane.b32.xlu0 %v856, 112
    %v869 = vpop.permute.xlu0 %868
    %870 = vrot.lane.b32.xlu0 %v857, 112
    %v871 = vpop.permute.xlu0 %870
    %872 = vrot.lane.b32.xlu0 %v858, 112
    %v873 = vpop.permute.xlu0 %872
    %874 = vrot.lane.b32.xlu0 %v859, 112
    %v875 = vpop.permute.xlu0 %874
    %876 = vrot.lane.b32.xlu0 %v860, 112
    %v877 = vpop.permute.xlu0 %876
    %878 = vrot.lane.b32.xlu0 %v861, 112
    %v879 = vpop.permute.xlu0 %878
    %v880 = vsel %vm837, %v869, %v871
    %v881 = vsel %vm837, %v871, %v873
    %v882 = vsel %vm837, %v875, %v877
    %v883 = vsel %vm837, %v877, %v879
    %v888 = vadd.f32 %v880, %v881
    %v889 = vadd.f32 %v888, %v882
    %v890 = vadd.f32 %v889, %v883
    %891 = vadd.xlane.f32.xlu0 %v890
    %v892 = vpop.xlane.xlu0 %891
    %v893 = vadd.f32 %v583, %v892
    %v894 = vld [vmem:[%s1] sm:$0xff]
    %v899 = vperm.slane %v91, 0
    %v900 = vperm.slane %v91, 4
    %v901 = vperm.slane %v92, 0
    %v902 = vperm.slane %v93, 0
    %v903 = vperm.slane %v93, 4
    %v904 = vperm.slane %v94, 0
    %v911 = vperm.slane %v899, 0
    %v912 = vperm.slane %v900, 0
    %v913 = vperm.slane %v901, 0
    %v914 = vperm.slane %v902, 0
    %v915 = vperm.slane %v903, 0
    %v916 = vperm.slane %v904, 0
    %918 = vset.pattern.permute.xlu0 0
    %919 = vperm.xlu0 %918, %v894
    %v920 = vpop.permute.xlu0 %919
    %v922 = vmul.f32 %v911, %v920
    %v923 = vmul.f32 %v912, %v920
    %v924 = vmul.f32 %v913, %v920
    %v925 = vmul.f32 %v914, %v920
    %v926 = vmul.f32 %v915, %v920
    %v927 = vmul.f32 %v916, %v920
    %v928 = vadd.f32 %v922, 0.0
    %v929 = vadd.f32 %v923, 0.0
    %v930 = vadd.f32 %v924, 0.0
    %v931 = vadd.f32 %v925, 0.0
    %v932 = vadd.f32 %v926, 0.0
    %v933 = vadd.f32 %v927, 0.0
    %v934 = vperm.slane %v91, 1
    %v935 = vperm.slane %v91, 5
    %v936 = vperm.slane %v92, 1
    %v937 = vperm.slane %v93, 1
    %v938 = vperm.slane %v93, 5
    %v939 = vperm.slane %v94, 1
    %v946 = vperm.slane %v934, 1
    %v947 = vperm.slane %v935, 1
    %v948 = vperm.slane %v936, 1
    %v949 = vperm.slane %v937, 1
    %v950 = vperm.slane %v938, 1
    %v951 = vperm.slane %v939, 1
    %952 = vset.pattern.permute.xlu0 1
    %953 = vperm.xlu0 %952, %v894
    %v954 = vpop.permute.xlu0 %953
    %v956 = vmul.f32 %v946, %v954
    %v957 = vmul.f32 %v947, %v954
    %v958 = vmul.f32 %v948, %v954
    %v959 = vmul.f32 %v949, %v954
    %v960 = vmul.f32 %v950, %v954
    %v961 = vmul.f32 %v951, %v954
    %v962 = vadd.f32 %v928, %v956
    %v963 = vadd.f32 %v929, %v957
    %v964 = vadd.f32 %v930, %v958
    %v965 = vadd.f32 %v931, %v959
    %v966 = vadd.f32 %v932, %v960
    %v967 = vadd.f32 %v933, %v961
    %v968 = vperm.slane %v91, 2
    %v969 = vperm.slane %v91, 6
    %v970 = vperm.slane %v92, 2
    %v971 = vperm.slane %v93, 2
    %v972 = vperm.slane %v93, 6
    %v973 = vperm.slane %v94, 2
    %v980 = vperm.slane %v968, 2
    %v981 = vperm.slane %v969, 2
    %v982 = vperm.slane %v970, 2
    %v983 = vperm.slane %v971, 2
    %v984 = vperm.slane %v972, 2
    %v985 = vperm.slane %v973, 2
    %986 = vset.pattern.permute.xlu0 2
    %987 = vperm.xlu0 %986, %v894
    %v988 = vpop.permute.xlu0 %987
    %v990 = vmul.f32 %v980, %v988
    %v991 = vmul.f32 %v981, %v988
    %v992 = vmul.f32 %v982, %v988
    %v993 = vmul.f32 %v983, %v988
    %v994 = vmul.f32 %v984, %v988
    %v995 = vmul.f32 %v985, %v988
    %v996 = vadd.f32 %v962, %v990
    %v997 = vadd.f32 %v963, %v991
    %v998 = vadd.f32 %v964, %v992
    %v999 = vadd.f32 %v965, %v993
    %v1000 = vadd.f32 %v966, %v994
    %v1001 = vadd.f32 %v967, %v995
    %v1002 = vperm.slane %v91, 3
    %v1003 = vperm.slane %v91, 7
    %v1004 = vperm.slane %v92, 3
    %v1005 = vperm.slane %v93, 3
    %v1006 = vperm.slane %v93, 7
    %v1007 = vperm.slane %v94, 3
    %v1014 = vperm.slane %v1002, 3
    %v1015 = vperm.slane %v1003, 3
    %v1016 = vperm.slane %v1004, 3
    %v1017 = vperm.slane %v1005, 3
    %v1018 = vperm.slane %v1006, 3
    %v1019 = vperm.slane %v1007, 3
    %1020 = vset.pattern.permute.xlu0 3
    %1021 = vperm.xlu0 %1020, %v894
    %v1022 = vpop.permute.xlu0 %1021
    %v1024 = vmul.f32 %v1014, %v1022
    %v1025 = vmul.f32 %v1015, %v1022
    %v1026 = vmul.f32 %v1016, %v1022
    %v1027 = vmul.f32 %v1017, %v1022
    %v1028 = vmul.f32 %v1018, %v1022
    %v1029 = vmul.f32 %v1019, %v1022
    %v1030 = vadd.f32 %v996, %v1024
    %v1031 = vadd.f32 %v997, %v1025
    %v1032 = vadd.f32 %v998, %v1026
    %v1033 = vadd.f32 %v999, %v1027
    %v1034 = vadd.f32 %v1000, %v1028
    %v1035 = vadd.f32 %v1001, %v1029
    %1036 = vset.pattern.permute.xlu0 8
    %1037 = vperm.xlu0 %1036, %v894
    %v1038 = vpop.permute.xlu0 %1037
    %v1040 = vmul.f32 %v107, %v1038
    %v1041 = vmul.f32 %v108, %v1038
    %v1042 = vmul.f32 %v591, %v1038
    %v1043 = vmul.f32 %v109, %v1038
    %v1044 = vmul.f32 %v110, %v1038
    %v1045 = vmul.f32 %v592, %v1038
    %1052 = vrot.lane.b32.xlu0 %v1040, 1
    %v1053 = vpop.permute.xlu0 %1052
    %1054 = vrot.lane.b32.xlu0 %v1041, 1
    %v1055 = vpop.permute.xlu0 %1054
    %1056 = vrot.lane.b32.xlu0 %v1042, 1
    %v1057 = vpop.permute.xlu0 %1056
    %1058 = vrot.lane.b32.xlu0 %v1043, 1
    %v1059 = vpop.permute.xlu0 %1058
    %1060 = vrot.lane.b32.xlu0 %v1044, 1
    %v1061 = vpop.permute.xlu0 %1060
    %1062 = vrot.lane.b32.xlu0 %v1045, 1
    %v1063 = vpop.permute.xlu0 %1062
    %v1064 = vsel %vm76, %v1053, %v1055
    %v1065 = vsel %vm76, %v1055, %v1057
    %v1066 = vsel %vm76, %v1059, %v1061
    %v1067 = vsel %vm76, %v1061, %v1063
    %v1074 = vadd.f32 %v1030, %v1053
    %v1075 = vadd.f32 %v1031, %v1064
    %v1076 = vadd.f32 %v1032, %v1065
    %v1077 = vadd.f32 %v1033, %v1059
    %v1078 = vadd.f32 %v1034, %v1066
    %v1079 = vadd.f32 %v1035, %v1067
    %1080 = vset.pattern.permute.xlu0 9
    %1081 = vperm.xlu0 %1080, %v894
    %v1082 = vpop.permute.xlu0 %1081
    %v1084 = vmul.f32 %v132, %v1082
    %v1085 = vmul.f32 %v133, %v1082
    %v1086 = vmul.f32 %v614, %v1082
    %v1087 = vmul.f32 %v134, %v1082
    %v1088 = vmul.f32 %v135, %v1082
    %v1089 = vmul.f32 %v615, %v1082
    %1096 = vrot.lane.b32.xlu0 %v1084, 1
    %v1097 = vpop.permute.xlu0 %1096
    %1098 = vrot.lane.b32.xlu0 %v1085, 1
    %v1099 = vpop.permute.xlu0 %1098
    %1100 = vrot.lane.b32.xlu0 %v1086, 1
    %v1101 = vpop.permute.xlu0 %1100
    %1102 = vrot.lane.b32.xlu0 %v1087, 1
    %v1103 = vpop.permute.xlu0 %1102
    %1104 = vrot.lane.b32.xlu0 %v1088, 1
    %v1105 = vpop.permute.xlu0 %1104
    %1106 = vrot.lane.b32.xlu0 %v1089, 1
    %v1107 = vpop.permute.xlu0 %1106
    %v1108 = vsel %vm76, %v1097, %v1099
    %v1109 = vsel %vm76, %v1099, %v1101
    %v1110 = vsel %vm76, %v1103, %v1105
    %v1111 = vsel %vm76, %v1105, %v1107
    %v1118 = vadd.f32 %v1074, %v1097
    %v1119 = vadd.f32 %v1075, %v1108
    %v1120 = vadd.f32 %v1076, %v1109
    %v1121 = vadd.f32 %v1077, %v1103
    %v1122 = vadd.f32 %v1078, %v1110
    %v1123 = vadd.f32 %v1079, %v1111
    %1124 = vset.pattern.permute.xlu0 10
    %1125 = vperm.xlu0 %1124, %v894
    %v1126 = vpop.permute.xlu0 %1125
    %v1128 = vmul.f32 %v156, %v1126
    %v1129 = vmul.f32 %v157, %v1126
    %v1130 = vmul.f32 %v636, %v1126
    %v1131 = vmul.f32 %v158, %v1126
    %v1132 = vmul.f32 %v159, %v1126
    %v1133 = vmul.f32 %v637, %v1126
    %1140 = vrot.lane.b32.xlu0 %v1128, 1
    %v1141 = vpop.permute.xlu0 %1140
    %1142 = vrot.lane.b32.xlu0 %v1129, 1
    %v1143 = vpop.permute.xlu0 %1142
    %1144 = vrot.lane.b32.xlu0 %v1130, 1
    %v1145 = vpop.permute.xlu0 %1144
    %1146 = vrot.lane.b32.xlu0 %v1131, 1
    %v1147 = vpop.permute.xlu0 %1146
    %1148 = vrot.lane.b32.xlu0 %v1132, 1
    %v1149 = vpop.permute.xlu0 %1148
    %1150 = vrot.lane.b32.xlu0 %v1133, 1
    %v1151 = vpop.permute.xlu0 %1150
    %v1152 = vsel %vm76, %v1141, %v1143
    %v1153 = vsel %vm76, %v1143, %v1145
    %v1154 = vsel %vm76, %v1147, %v1149
    %v1155 = vsel %vm76, %v1149, %v1151
    %v1162 = vadd.f32 %v1118, %v1141
    %v1163 = vadd.f32 %v1119, %v1152
    %v1164 = vadd.f32 %v1120, %v1153
    %v1165 = vadd.f32 %v1121, %v1147
    %v1166 = vadd.f32 %v1122, %v1154
    %v1167 = vadd.f32 %v1123, %v1155
    %1168 = vset.pattern.permute.xlu0 11
    %1169 = vperm.xlu0 %1168, %v894
    %v1170 = vpop.permute.xlu0 %1169
    %v1172 = vmul.f32 %v180, %v1170
    %v1173 = vmul.f32 %v181, %v1170
    %v1174 = vmul.f32 %v658, %v1170
    %v1175 = vmul.f32 %v182, %v1170
    %v1176 = vmul.f32 %v183, %v1170
    %v1177 = vmul.f32 %v659, %v1170
    %1184 = vrot.lane.b32.xlu0 %v1172, 1
    %v1185 = vpop.permute.xlu0 %1184
    %1186 = vrot.lane.b32.xlu0 %v1173, 1
    %v1187 = vpop.permute.xlu0 %1186
    %1188 = vrot.lane.b32.xlu0 %v1174, 1
    %v1189 = vpop.permute.xlu0 %1188
    %1190 = vrot.lane.b32.xlu0 %v1175, 1
    %v1191 = vpop.permute.xlu0 %1190
    %1192 = vrot.lane.b32.xlu0 %v1176, 1
    %v1193 = vpop.permute.xlu0 %1192
    %1194 = vrot.lane.b32.xlu0 %v1177, 1
    %v1195 = vpop.permute.xlu0 %1194
    %v1196 = vsel %vm76, %v1185, %v1187
    %v1197 = vsel %vm76, %v1187, %v1189
    %v1198 = vsel %vm76, %v1191, %v1193
    %v1199 = vsel %vm76, %v1193, %v1195
    %v1206 = vadd.f32 %v1162, %v1185
    %v1207 = vadd.f32 %v1163, %v1196
    %v1208 = vadd.f32 %v1164, %v1197
    %v1209 = vadd.f32 %v1165, %v1191
    %v1210 = vadd.f32 %v1166, %v1198
    %v1211 = vadd.f32 %v1167, %v1199
    %1212 = vset.pattern.permute.xlu0 24
    %1213 = vperm.xlu0 %1212, %v894
    %v1214 = vpop.permute.xlu0 %1213
    %v1216 = vmul.f32 %v242, %v1214
    %v1217 = vmul.f32 %v243, %v1214
    %v1218 = vmul.f32 %v244, %v1214
    %v1219 = vmul.f32 %v245, %v1214
    %v1220 = vmul.f32 %v246, %v1214
    %v1221 = vmul.f32 %v247, %v1214
    %1228 = vrot.lane.b32.xlu0 %v1216, 16
    %v1229 = vpop.permute.xlu0 %1228
    %1230 = vrot.lane.b32.xlu0 %v1217, 16
    %v1231 = vpop.permute.xlu0 %1230
    %1232 = vrot.lane.b32.xlu0 %v1218, 16
    %v1233 = vpop.permute.xlu0 %1232
    %1234 = vrot.lane.b32.xlu0 %v1219, 16
    %v1235 = vpop.permute.xlu0 %1234
    %1236 = vrot.lane.b32.xlu0 %v1220, 16
    %v1237 = vpop.permute.xlu0 %1236
    %1238 = vrot.lane.b32.xlu0 %v1221, 16
    %v1239 = vpop.permute.xlu0 %1238
    %v1240 = vsel %vm696, %v1229, %v1231
    %v1241 = vsel %vm696, %v1231, %v1233
    %v1242 = vsel %vm696, %v1235, %v1237
    %v1243 = vsel %vm696, %v1237, %v1239
    %v1250 = vadd.f32 %v1206, %v1229
    %v1251 = vadd.f32 %v1207, %v1240
    %v1252 = vadd.f32 %v1208, %v1241
    %v1253 = vadd.f32 %v1209, %v1235
    %v1254 = vadd.f32 %v1210, %v1242
    %v1255 = vadd.f32 %v1211, %v1243
    %1256 = vset.pattern.permute.xlu0 25
    %1257 = vperm.xlu0 %1256, %v894
    %v1258 = vpop.permute.xlu0 %1257
    %v1260 = vmul.f32 %v277, %v1258
    %v1261 = vmul.f32 %v278, %v1258
    %v1262 = vmul.f32 %v279, %v1258
    %v1263 = vmul.f32 %v280, %v1258
    %v1264 = vmul.f32 %v281, %v1258
    %v1265 = vmul.f32 %v282, %v1258
    %1272 = vrot.lane.b32.xlu0 %v1260, 16
    %v1273 = vpop.permute.xlu0 %1272
    %1274 = vrot.lane.b32.xlu0 %v1261, 16
    %v1275 = vpop.permute.xlu0 %1274
    %1276 = vrot.lane.b32.xlu0 %v1262, 16
    %v1277 = vpop.permute.xlu0 %1276
    %1278 = vrot.lane.b32.xlu0 %v1263, 16
    %v1279 = vpop.permute.xlu0 %1278
    %1280 = vrot.lane.b32.xlu0 %v1264, 16
    %v1281 = vpop.permute.xlu0 %1280
    %1282 = vrot.lane.b32.xlu0 %v1265, 16
    %v1283 = vpop.permute.xlu0 %1282
    %v1284 = vsel %vm696, %v1273, %v1275
    %v1285 = vsel %vm696, %v1275, %v1277
    %v1286 = vsel %vm696, %v1279, %v1281
    %v1287 = vsel %vm696, %v1281, %v1283
    %v1294 = vadd.f32 %v1250, %v1273
    %v1295 = vadd.f32 %v1251, %v1284
    %v1296 = vadd.f32 %v1252, %v1285
    %v1297 = vadd.f32 %v1253, %v1279
    %v1298 = vadd.f32 %v1254, %v1286
    %v1299 = vadd.f32 %v1255, %v1287
    %1300 = vset.pattern.permute.xlu0 26
    %1301 = vperm.xlu0 %1300, %v894
    %v1302 = vpop.permute.xlu0 %1301
    %v1304 = vmul.f32 %v311, %v1302
    %v1305 = vmul.f32 %v312, %v1302
    %v1306 = vmul.f32 %v313, %v1302
    %v1307 = vmul.f32 %v314, %v1302
    %v1308 = vmul.f32 %v315, %v1302
    %v1309 = vmul.f32 %v316, %v1302
    %1316 = vrot.lane.b32.xlu0 %v1304, 16
    %v1317 = vpop.permute.xlu0 %1316
    %1318 = vrot.lane.b32.xlu0 %v1305, 16
    %v1319 = vpop.permute.xlu0 %1318
    %1320 = vrot.lane.b32.xlu0 %v1306, 16
    %v1321 = vpop.permute.xlu0 %1320
    %1322 = vrot.lane.b32.xlu0 %v1307, 16
    %v1323 = vpop.permute.xlu0 %1322
    %1324 = vrot.lane.b32.xlu0 %v1308, 16
    %v1325 = vpop.permute.xlu0 %1324
    %1326 = vrot.lane.b32.xlu0 %v1309, 16
    %v1327 = vpop.permute.xlu0 %1326
    %v1328 = vsel %vm696, %v1317, %v1319
    %v1329 = vsel %vm696, %v1319, %v1321
    %v1330 = vsel %vm696, %v1323, %v1325
    %v1331 = vsel %vm696, %v1325, %v1327
    %v1338 = vadd.f32 %v1294, %v1317
    %v1339 = vadd.f32 %v1295, %v1328
    %v1340 = vadd.f32 %v1296, %v1329
    %v1341 = vadd.f32 %v1297, %v1323
    %v1342 = vadd.f32 %v1298, %v1330
    %v1343 = vadd.f32 %v1299, %v1331
    %1344 = vset.pattern.permute.xlu0 27
    %1345 = vperm.xlu0 %1344, %v894
    %v1346 = vpop.permute.xlu0 %1345
    %v1348 = vmul.f32 %v345, %v1346
    %v1349 = vmul.f32 %v346, %v1346
    %v1350 = vmul.f32 %v347, %v1346
    %v1351 = vmul.f32 %v348, %v1346
    %v1352 = vmul.f32 %v349, %v1346
    %v1353 = vmul.f32 %v350, %v1346
    %1360 = vrot.lane.b32.xlu0 %v1348, 16
    %v1361 = vpop.permute.xlu0 %1360
    %1362 = vrot.lane.b32.xlu0 %v1349, 16
    %v1363 = vpop.permute.xlu0 %1362
    %1364 = vrot.lane.b32.xlu0 %v1350, 16
    %v1365 = vpop.permute.xlu0 %1364
    %1366 = vrot.lane.b32.xlu0 %v1351, 16
    %v1367 = vpop.permute.xlu0 %1366
    %1368 = vrot.lane.b32.xlu0 %v1352, 16
    %v1369 = vpop.permute.xlu0 %1368
    %1370 = vrot.lane.b32.xlu0 %v1353, 16
    %v1371 = vpop.permute.xlu0 %1370
    %v1372 = vsel %vm696, %v1361, %v1363
    %v1373 = vsel %vm696, %v1363, %v1365
    %v1374 = vsel %vm696, %v1367, %v1369
    %v1375 = vsel %vm696, %v1369, %v1371
    %v1382 = vadd.f32 %v1338, %v1361
    %v1383 = vadd.f32 %v1339, %v1372
    %v1384 = vadd.f32 %v1340, %v1373
    %v1385 = vadd.f32 %v1341, %v1367
    %v1386 = vadd.f32 %v1342, %v1374
    %v1387 = vadd.f32 %v1343, %v1375
    %1388 = vset.pattern.permute.xlu0 32
    %1389 = vperm.xlu0 %1388, %v894
    %v1390 = vpop.permute.xlu0 %1389
    %v1392 = vmul.f32 %v107, %v1390
    %v1393 = vmul.f32 %v108, %v1390
    %v1394 = vmul.f32 %v109, %v1390
    %v1395 = vmul.f32 %v110, %v1390
    %1400 = vrot.lane.b32.xlu0 %v1392, 17
    %v1401 = vpop.permute.xlu0 %1400
    %1402 = vrot.lane.b32.xlu0 %v1393, 17
    %v1403 = vpop.permute.xlu0 %1402
    %1404 = vrot.lane.b32.xlu0 %v1394, 17
    %v1405 = vpop.permute.xlu0 %1404
    %1406 = vrot.lane.b32.xlu0 %v1395, 17
    %v1407 = vpop.permute.xlu0 %1406
    %v1408 = vsel %vm87, %v1401, %v1403
    %v1409 = vsel %vm87, %v1405, %v1407
    %v1416 = vadd.f32 %v1382, %v1401
    %v1417 = vadd.f32 %v1383, %v1408
    %v1418 = vadd.f32 %v1384, %v1403
    %v1419 = vadd.f32 %v1385, %v1405
    %v1420 = vadd.f32 %v1386, %v1409
    %v1421 = vadd.f32 %v1387, %v1407
    %1422 = vset.pattern.permute.xlu0 33
    %1423 = vperm.xlu0 %1422, %v894
    %v1424 = vpop.permute.xlu0 %1423
    %v1426 = vmul.f32 %v132, %v1424
    %v1427 = vmul.f32 %v133, %v1424
    %v1428 = vmul.f32 %v134, %v1424
    %v1429 = vmul.f32 %v135, %v1424
    %1434 = vrot.lane.b32.xlu0 %v1426, 17
    %v1435 = vpop.permute.xlu0 %1434
    %1436 = vrot.lane.b32.xlu0 %v1427, 17
    %v1437 = vpop.permute.xlu0 %1436
    %1438 = vrot.lane.b32.xlu0 %v1428, 17
    %v1439 = vpop.permute.xlu0 %1438
    %1440 = vrot.lane.b32.xlu0 %v1429, 17
    %v1441 = vpop.permute.xlu0 %1440
    %v1442 = vsel %vm87, %v1435, %v1437
    %v1443 = vsel %vm87, %v1439, %v1441
    %v1450 = vadd.f32 %v1416, %v1435
    %v1451 = vadd.f32 %v1417, %v1442
    %v1452 = vadd.f32 %v1418, %v1437
    %v1453 = vadd.f32 %v1419, %v1439
    %v1454 = vadd.f32 %v1420, %v1443
    %v1455 = vadd.f32 %v1421, %v1441
    %1456 = vset.pattern.permute.xlu0 34
    %1457 = vperm.xlu0 %1456, %v894
    %v1458 = vpop.permute.xlu0 %1457
    %v1460 = vmul.f32 %v156, %v1458
    %v1461 = vmul.f32 %v157, %v1458
    %v1462 = vmul.f32 %v158, %v1458
    %v1463 = vmul.f32 %v159, %v1458
    %1468 = vrot.lane.b32.xlu0 %v1460, 17
    %v1469 = vpop.permute.xlu0 %1468
    %1470 = vrot.lane.b32.xlu0 %v1461, 17
    %v1471 = vpop.permute.xlu0 %1470
    %1472 = vrot.lane.b32.xlu0 %v1462, 17
    %v1473 = vpop.permute.xlu0 %1472
    %1474 = vrot.lane.b32.xlu0 %v1463, 17
    %v1475 = vpop.permute.xlu0 %1474
    %v1476 = vsel %vm87, %v1469, %v1471
    %v1477 = vsel %vm87, %v1473, %v1475
    %v1484 = vadd.f32 %v1450, %v1469
    %v1485 = vadd.f32 %v1451, %v1476
    %v1486 = vadd.f32 %v1452, %v1471
    %v1487 = vadd.f32 %v1453, %v1473
    %v1488 = vadd.f32 %v1454, %v1477
    %v1489 = vadd.f32 %v1455, %v1475
    %1490 = vset.pattern.permute.xlu0 35
    %1491 = vperm.xlu0 %1490, %v894
    %v1492 = vpop.permute.xlu0 %1491
    %v1494 = vmul.f32 %v180, %v1492
    %v1495 = vmul.f32 %v181, %v1492
    %v1496 = vmul.f32 %v182, %v1492
    %v1497 = vmul.f32 %v183, %v1492
    %1502 = vrot.lane.b32.xlu0 %v1494, 17
    %v1503 = vpop.permute.xlu0 %1502
    %1504 = vrot.lane.b32.xlu0 %v1495, 17
    %v1505 = vpop.permute.xlu0 %1504
    %1506 = vrot.lane.b32.xlu0 %v1496, 17
    %v1507 = vpop.permute.xlu0 %1506
    %1508 = vrot.lane.b32.xlu0 %v1497, 17
    %v1509 = vpop.permute.xlu0 %1508
    %v1510 = vsel %vm87, %v1503, %v1505
    %v1511 = vsel %vm87, %v1507, %v1509
    %v1518 = vadd.f32 %v1484, %v1503
    %v1519 = vadd.f32 %v1485, %v1510
    %v1520 = vadd.f32 %v1486, %v1505
    %v1521 = vadd.f32 %v1487, %v1507
    %v1522 = vadd.f32 %v1488, %v1511
    %v1523 = vadd.f32 %v1489, %v1509
    %v1524 = vadd.f32 %v1518, %v199
    %v1525 = vadd.f32 %v1519, %v199
    %v1526 = vadd.f32 %v1520, %v199
    %v1527 = vadd.f32 %v1521, %v199
    %v1528 = vadd.f32 %v1522, %v199
    %v1529 = vadd.f32 %v1523, %v199
    %1536 = vrot.lane.b32.xlu0 %v1524, 111
    %v1537 = vpop.permute.xlu0 %1536
    %1538 = vrot.lane.b32.xlu0 %v1525, 111
    %v1539 = vpop.permute.xlu0 %1538
    %1540 = vrot.lane.b32.xlu0 %v1526, 111
    %v1541 = vpop.permute.xlu0 %1540
    %1542 = vrot.lane.b32.xlu0 %v1527, 111
    %v1543 = vpop.permute.xlu0 %1542
    %1544 = vrot.lane.b32.xlu0 %v1528, 111
    %v1545 = vpop.permute.xlu0 %1544
    %1546 = vrot.lane.b32.xlu0 %v1529, 111
    %v1547 = vpop.permute.xlu0 %1546
    %vm1548 = vcmask 908288
    %v1549 = vsel %vm1548, %v1537, %v1539
    %v1550 = vsel %vm1548, %v1539, %v1541
    %v1551 = vsel %vm1548, %v1543, %v1545
    %v1552 = vsel %vm1548, %v1545, %v1547
    %1557 = vst [vmem:[#allocation5 + $0x30] sm:$0xff] %v1549
    %1558 = vst [vmem:[#allocation5 + $0x38] sm:$0xff] %v1550
    %1559 = vst [vmem:[#allocation5 + $0x70] sm:$0xff] %v1551
    %1560 = vst [vmem:[#allocation5 + $0x78] sm:$0xff] %v1552
    %v1561 = vadd.f32 %v1549, %v1550
    %v1562 = vadd.f32 %v1561, %v1551
    %v1563 = vadd.f32 %v1562, %v1552
    %1564 = vadd.xlane.f32.xlu0 %v1563
    %v1565 = vpop.xlane.xlu0 %1564
    %v1566 = vadd.f32 %v855, %v1565
    %v1567 = vmul.f32 %v1524, %v1524
    %v1568 = vmul.f32 %v1525, %v1525
    %v1569 = vmul.f32 %v1526, %v1526
    %v1570 = vmul.f32 %v1527, %v1527
    %v1571 = vmul.f32 %v1528, %v1528
    %v1572 = vmul.f32 %v1529, %v1529
    %1579 = vrot.lane.b32.xlu0 %v1567, 111
    %v1580 = vpop.permute.xlu0 %1579
    %1581 = vrot.lane.b32.xlu0 %v1568, 111
    %v1582 = vpop.permute.xlu0 %1581
    %1583 = vrot.lane.b32.xlu0 %v1569, 111
    %v1584 = vpop.permute.xlu0 %1583
    %1585 = vrot.lane.b32.xlu0 %v1570, 111
    %v1586 = vpop.permute.xlu0 %1585
    %1587 = vrot.lane.b32.xlu0 %v1571, 111
    %v1588 = vpop.permute.xlu0 %1587
    %1589 = vrot.lane.b32.xlu0 %v1572, 111
    %v1590 = vpop.permute.xlu0 %1589
    %v1591 = vsel %vm1548, %v1580, %v1582
    %v1592 = vsel %vm1548, %v1582, %v1584
    %v1593 = vsel %vm1548, %v1586, %v1588
    %v1594 = vsel %vm1548, %v1588, %v1590
    %v1599 = vadd.f32 %v1591, %v1592
    %v1600 = vadd.f32 %v1599, %v1593
    %v1601 = vadd.f32 %v1600, %v1594
    %1602 = vadd.xlane.f32.xlu0 %v1601
    %v1603 = vpop.xlane.xlu0 %1602
    %v1604 = vadd.f32 %v893, %v1603
    %v1605 = vmul.f32 %v1566, 0.00048828125
    %v1606 = vmul.f32 %v1604, 0.00048828125
    %v1607 = vmul.f32 %v1605, %v1605
    %v1608 = vsub.f32 %v1606, %v1607
    %v1609 = vadd.f32 %v1608, 0.001
    %v1610 = vrsqrt.pop %v1609
    %v1611 = vmul.f32 %v1610, %v1609
    %v1612 = vmul.f32 %v1611, %v1610
    %v1613 = vmul.f32 0.5, %v1612
    %v1614 = vsub.f32 1.5, %v1613
    %v1615 = vmul.f32 %v1610, %v1614
    %vm1616 = vweird.f32 %v1609
    %vm1617 = vweird.f32 %v1610
    %vm1618 = vmor %vm1616, %vm1617
    %v1619 = vsel %vm1618, %v1610, %v1615
    %v1620 = vmul.f32 %v95, %v1619
    %v1621 = vmul.f32 %v1605, %v1620
    %1623 = vrot.lane.b32.xlu0 %v1621, 1
    %v1624 = vpop.permute.xlu0 %1623
    %v1626 = vsub.f32 %v95, %v1624
    %v1627 = vld [vmem:[#allocation5] sm:$0xff]
    %v1628 = vld [vmem:[#allocation5 + $0x8] sm:$0xff]
    %v1629 = vld [vmem:[#allocation5 + $0x40] sm:$0xff]
    %v1630 = vld [vmem:[#allocation5 + $0x48] sm:$0xff]
    %1632 = vset.pattern.permute.xlu0 1
    %1633 = vperm.xlu0 %1632, %v1620
    %v1634 = vpop.permute.xlu0 %1633
    %v1636 = vmul.f32 %v1627, %v1634
    %v1637 = vmul.f32 %v1628, %v1634
    %v1638 = vmul.f32 %v1629, %v1634
    %v1639 = vmul.f32 %v1630, %v1634
    %1641 = vset.pattern.permute.xlu0 2
    %1642 = vperm.xlu0 %1641, %v1626
    %v1643 = vpop.permute.xlu0 %1642
    %v1645 = vadd.f32 %v1636, %v1643
    %v1646 = vadd.f32 %v1637, %v1643
    %v1647 = vadd.f32 %v1638, %v1643
    %v1648 = vadd.f32 %v1639, %v1643
    %v1649 = vmax.f32 %v1645, 0.0
    %v1650 = vmax.f32 %v1646, 0.0
    %v1651 = vmax.f32 %v1647, 0.0
    %v1652 = vmax.f32 %v1648, 0.0
    %1653 = vst [vmem:[#allocation5] sm:$0xff] %v1649
    %1654 = vst [vmem:[#allocation5 + $0x8] sm:$0xff] %v1650
    %1655 = vst [vmem:[#allocation5 + $0x40] sm:$0xff] %v1651
    %1656 = vst [vmem:[#allocation5 + $0x48] sm:$0xff] %v1652
    %v1657 = vld [vmem:[#allocation5 + $0x10] sm:$0xff]
    %v1658 = vld [vmem:[#allocation5 + $0x18] sm:$0xff]
    %v1659 = vld [vmem:[#allocation5 + $0x50] sm:$0xff]
    %v1660 = vld [vmem:[#allocation5 + $0x58] sm:$0xff]
    %v1661 = vmul.f32 %v1657, %v1634
    %v1662 = vmul.f32 %v1658, %v1634
    %v1663 = vmul.f32 %v1659, %v1634
    %v1664 = vmul.f32 %v1660, %v1634
    %v1665 = vadd.f32 %v1661, %v1643
    %v1666 = vadd.f32 %v1662, %v1643
    %v1667 = vadd.f32 %v1663, %v1643
    %v1668 = vadd.f32 %v1664, %v1643
    %v1669 = vmax.f32 %v1665, 0.0
    %v1670 = vmax.f32 %v1666, 0.0
    %v1671 = vmax.f32 %v1667, 0.0
    %v1672 = vmax.f32 %v1668, 0.0
    %1673 = vst [vmem:[#allocation5 + $0x10] sm:$0xff] %v1669
    %1674 = vst [vmem:[#allocation5 + $0x18] sm:$0xff] %v1670
    %1675 = vst [vmem:[#allocation5 + $0x50] sm:$0xff] %v1671
    %1676 = vst [vmem:[#allocation5 + $0x58] sm:$0xff] %v1672
    %v1677 = vld [vmem:[#allocation5 + $0x20] sm:$0xff]
    %v1678 = vld [vmem:[#allocation5 + $0x28] sm:$0xff]
    %v1679 = vld [vmem:[#allocation5 + $0x60] sm:$0xff]
    %v1680 = vld [vmem:[#allocation5 + $0x68] sm:$0xff]
    %v1681 = vmul.f32 %v1677, %v1634
    %v1682 = vmul.f32 %v1678, %v1634
    %v1683 = vmul.f32 %v1679, %v1634
    %v1684 = vmul.f32 %v1680, %v1634
    %v1685 = vadd.f32 %v1681, %v1643
    %v1686 = vadd.f32 %v1682, %v1643
    %v1687 = vadd.f32 %v1683, %v1643
    %v1688 = vadd.f32 %v1684, %v1643
    %v1689 = vmax.f32 %v1685, 0.0
    %v1690 = vmax.f32 %v1686, 0.0
    %v1691 = vmax.f32 %v1687, 0.0
    %v1692 = vmax.f32 %v1688, 0.0
    %1693 = vst [vmem:[#allocation5 + $0x20] sm:$0xff] %v1689
    %1694 = vst [vmem:[#allocation5 + $0x28] sm:$0xff] %v1690
    %1695 = vst [vmem:[#allocation5 + $0x60] sm:$0xff] %v1691
    %1696 = vst [vmem:[#allocation5 + $0x68] sm:$0xff] %v1692
    %v1697 = vld [vmem:[#allocation5 + $0x30] sm:$0xff]
    %v1698 = vld [vmem:[#allocation5 + $0x38] sm:$0xff]
    %v1699 = vld [vmem:[#allocation5 + $0x70] sm:$0xff]
    %v1700 = vld [vmem:[#allocation5 + $0x78] sm:$0xff]
    %v1701 = vmul.f32 %v1697, %v1634
    %v1702 = vmul.f32 %v1698, %v1634
    %v1703 = vmul.f32 %v1699, %v1634
    %v1704 = vmul.f32 %v1700, %v1634
    %v1705 = vadd.f32 %v1701, %v1643
    %v1706 = vadd.f32 %v1702, %v1643
    %v1707 = vadd.f32 %v1703, %v1643
    %v1708 = vadd.f32 %v1704, %v1643
    %v1709 = vmax.f32 %v1705, 0.0
    %v1710 = vmax.f32 %v1706, 0.0
    %v1711 = vmax.f32 %v1707, 0.0
    %v1712 = vmax.f32 %v1708, 0.0
    %1713 = vst [vmem:[#allocation5 + $0x30] sm:$0xff] %v1709
    %1714 = vst [vmem:[#allocation5 + $0x38] sm:$0xff] %v1710
    %1715 = vst [vmem:[#allocation5 + $0x70] sm:$0xff] %v1711
    %1716 = vst [vmem:[#allocation5 + $0x78] sm:$0xff] %v1712
    // Predicated region
    $region18: #{tpu_custom_call.1} parent=1 // pred_check
      _
    $region19: #{tpu_custom_call.1} parent=1 // pred_check_branch
      %1718 = sbr.rel (0) target = $region21
    $region20: #{tpu_custom_call.1} parent=1 // pred_region
      %1720 = vsyncadd [#allocation4], 0
      %s1721 = sshll.u32 [#allocation5], 4
      %s1722 = int_to_ptr.vmem [resolvable:$true] %s1721
      %s1723 = sshll.u32 %s3, 4
      %s1724 = int_to_ptr.hbm [resolvable:$true] %s1723
      %1729 = dma.vmem_to_hbm [thread:$0]  %s1722, 2048, %s1724, [#allocation4], 1024, 1024, 64
    $region21: #{tpu_custom_call.1} parent=1 // pred_fallthru
      _
    // Predicated region
    $region22: #{tpu_custom_call.1} parent=1 // pred_check
      _
    $region23: #{tpu_custom_call.1} parent=1 // pred_check_branch
      %1731 = sbr.rel (0) target = $region25
    $region24: #{tpu_custom_call.1} parent=1 // pred_region
      %1733 = dma.done [#allocation4], 2048
    $region25: #{tpu_custom_call.1} parent=1 // pred_fallthru
      _
    %1734 = vsyncpa [#allocation3], 1
    %1735 = vsyncpa [#allocation4], 1

</llo_original>
